<compile_context>
chip_gen: v7x
topology: tpu7x:2x2x1
jax: 0.10.0
libtpu: 0.0.40
codegen_flags: <defaults>
</compile_context>

<pallas_src>
import jax
import jax.numpy as jnp
from jax import lax
from jax.experimental import pallas as pl
from jax.experimental.pallas import tpu as pltpu


def _window_masks(H, W, K):
    """(K*K, H*W) 0/1 masks: lane p=(h,w) of tap (kh,kw) is valid iff the source
    pixel (h+kh-K//2, w+kw-K//2) lies inside the image ("same" zero padding)."""
    hh = jnp.repeat(jnp.arange(H), W)
    ww = jnp.tile(jnp.arange(W), H)
    masks = []
    for kh in range(K):
        for kw in range(K):
            dy, dx = kh - K // 2, kw - K // 2
            valid = ((hh + dy >= 0) & (hh + dy < H) &
                     (ww + dx >= 0) & (ww + dx < W))
            masks.append(valid.astype(jnp.float32))
    return jnp.stack(masks, axis=0)


def _conv_mix_operator(w_spatial, n_batch):
    """Block-diagonal channel/tap mixing weight for the KxK conv.

    Shape (N*C_out, K*K*N*C_in); row (n, o), column (tap, n', i) holds
    w_spatial[o, i, tap] if n == n' else 0, so that
        y(N*C_out, HW) = mix @ window_stack(K*K*N*C_in, HW)
    performs the whole "same" convolution (all samples) in one MXU matmul.
    """
    c_out, c_in, k, _ = w_spatial.shape
    w_taps = jnp.transpose(w_spatial, (2, 3, 0, 1)).reshape(k * k, c_out, c_in)
    eye_n = jnp.eye(n_batch, dtype=w_spatial.dtype)
    mix = jnp.einsum("toi,nm->notmi", w_taps, eye_n)          # (n, o, tap, n', i)
    return mix.reshape(n_batch * c_out, k * k * n_batch * c_in)


def _spectral_factors(wspec_re, wspec_im, H, W, modes):
    """Factorized SpectralConv2d (rfft2 -> kept-mode mix -> irfft2).

        out_ft(N, C_out*2*NM) = x(N, C_in*H*W) @ FW
        wave(N*C_out, H*W)    = out_ft(N*C_out, 2*NM) @ G

    FW folds the complex spectral weights into the kept-mode forward DFT
    (real/imag packed along columns, ordering (o, re/im, mode)); G is the
    Hermitian-doubled inverse real DFT of the kept modes.  NM = 2*modes*modes.
    """
    c_in, c_out, m1x2, m2 = wspec_re.shape
    m1 = m1x2 // 2
    nm = m1x2 * m2
    kh = jnp.concatenate([jnp.arange(m1), jnp.arange(H - m1, H)]).astype(jnp.float32)
    kw = jnp.arange(m2, dtype=jnp.float32)
    hh = jnp.arange(H, dtype=jnp.float32)
    ww = jnp.arange(W, dtype=jnp.float32)
    # theta[a, b, h, w] = 2*pi*(kh_a*h/H + kw_b*w/W)
    theta = 2.0 * jnp.pi * (kh[:, None, None, None] * hh[None, None, :, None] / H
                            + kw[None, :, None, None] * ww[None, None, None, :] / W)
    f_re, f_im = jnp.cos(theta), -jnp.sin(theta)              # forward twiddle e^{-i theta}
    fw_re = (jnp.einsum("abhw,ioab->ihwoab", f_re, wspec_re)
             - jnp.einsum("abhw,ioab->ihwoab", f_im, wspec_im))
    fw_im = (jnp.einsum("abhw,ioab->ihwoab", f_re, wspec_im)
             + jnp.einsum("abhw,ioab->ihwoab", f_im, wspec_re))
    fw = jnp.stack([fw_re, fw_im], axis=4)                    # (i, h, w, o, re/im, a, b)
    fw = fw.reshape(c_in * H * W, c_out * 2 * nm)
    # Inverse real DFT of the kept modes; c doubles the Hermitian-mirrored columns.
    c = jnp.where((kw == 0) | (kw == W // 2), 1.0, 2.0)
    g_re = c[None, :, None, None] * jnp.cos(theta) / (H * W)
    g_im = c[None, :, None, None] * jnp.sin(theta) / (H * W)
    g = jnp.concatenate([g_re.reshape(nm, H * W), -g_im.reshape(nm, H * W)], axis=0)
    return fw, g


def soft_wave_spatial_attention(x, w_spatial, wspec_re, wspec_im, params, modes,
                                return_wave=True):
    """params = [spatial_scale, wave_scale, global_scale, balance_beta, softmax_temp]."""
    N, C, H, W = x.shape
    C_out, C_in, K, _ = w_spatial.shape
    assert C_out == C and C_in == C
    HW = H * W
    NC = N * C
    NM = 2 * modes * modes        # number of kept complex modes

    # Lane-dense bf16 activation slabs (all accumulation stays f32 in the kernel).
    x_rows = x.reshape(NC, HW).astype(jnp.bfloat16)           # rows (n, i)
    x_flat = x.reshape(N, C * HW).astype(jnp.bfloat16)        # per-sample (i, p) in lanes

    win_masks = _window_masks(H, W, K)                        # (K*K, HW) f32, exact in bf16/f32
    mix = _conv_mix_operator(w_spatial, N).astype(jnp.bfloat16)           # (NC, K*K*NC)
    fw, g = _spectral_factors(wspec_re, wspec_im, H, W, modes)
    fw = fw.astype(jnp.bfloat16)                                          # (C*HW, C*2*NM)
    g = g.astype(jnp.bfloat16)                                            # (2*NM, HW)

    def kernel(params_ref, xr_ref, xf_ref, msk_ref, mix_ref, fw_ref, g_ref, *rest):
        if return_wave:
            attn_ref, wave_ref, ft_scr = rest
        else:
            attn_ref, ft_scr = rest
            wave_ref = None

        spatial_scale = params_ref[0]      # Scale(1.0)
        wave_scale = params_ref[1]         # Scale(0.0)
        global_scale = params_ref[2]       # Scale(1.0)
        beta = params_ref[3]               # Balance()
        temp = params_ref[4]               # SpatialSoftmax2d(temp=1.0)

        xr = xr_ref[...].astype(jnp.float32)                  # (N*C, HW)

        # ---- spatial branch: KxK "same" conv --------------------------------
        # Window extraction = static lane roll + 0/1 edge mask (XLU/VPU slots);
        # channel/tap mix = ONE MXU matmul against the block-diagonal weight.
        taps = []
        t = 0
        for kh in range(K):
            for kw in range(K):
                dy, dx = kh - K // 2, kw - K // 2
                shift = (-(dy * W + dx)) % HW
                shifted = pltpu.roll(xr, shift=shift, axis=1) if shift else xr
                taps.append(shifted * msk_ref[t:t + 1, :])
                t += 1
        win = jnp.concatenate(taps, axis=0).astype(jnp.bfloat16)   # (K*K*N*C, HW)
        y = jnp.dot(mix_ref[...], win, preferred_element_type=jnp.float32)  # (N*C, HW)

        s = jax.nn.sigmoid(y) * (spatial_scale * temp)
        e = jnp.exp(s - jnp.max(s, axis=-1, keepdims=True))
        den = jnp.sum(e, axis=-1, keepdims=True)
        sp_attn = e * pl.reciprocal(den, approx=True)         # softmax over H*W (f32)

        # ---- wave branch: factorized SpectralConv2d --------------------------
        # Kept-mode rfft2 with the spectral weights folded in (one matmul) ...
        xw = jnp.dot(xf_ref[...], fw_ref[...],
                     preferred_element_type=jnp.float32)       # (N, C*2*NM)
        # ... lane->sublane relayout of the tiny (2 KiB) out_ft through VMEM so
        # its rows become (n, o) (this cross-row move is unavoidable) ...
        for n in range(N):
            for o in range(C):
                ft_scr[n * C + o:n * C + o + 1, :] = (
                    xw[n:n + 1, o * 2 * NM:(o + 1) * 2 * NM])
        out_ft = ft_scr[...].astype(jnp.bfloat16)              # (N*C, 2*NM)
        # ... then the Hermitian-doubled irfft2 (one matmul).
        wave = jnp.dot(out_ft, g_ref[...],
                       preferred_element_type=jnp.float32)     # (N*C, HW)

        wave_attn = jax.nn.sigmoid(wave * wave_scale)
        attn_ref[...] = (beta * sp_attn + (1.0 - beta) * wave_attn) * global_scale
        if return_wave:
            wave_ref[...] = wave

    out_shape = [jax.ShapeDtypeStruct((NC, HW), jnp.float32)]
    out_specs = [pl.BlockSpec((NC, HW), lambda i, p: (0, 0))]
    if return_wave:
        out_shape.append(jax.ShapeDtypeStruct((NC, HW), jnp.float32))
        out_specs.append(pl.BlockSpec((NC, HW), lambda i, p: (0, 0)))

    grid_spec = pltpu.PrefetchScalarGridSpec(
        num_scalar_prefetch=1,             # learnable scalars live in SMEM
        grid=(1,),                         # all samples batched into one step
        in_specs=[
            pl.BlockSpec((NC, HW), lambda i, p: (0, 0)),          # x_rows (bf16)
            pl.BlockSpec((N, C * HW), lambda i, p: (0, 0)),       # x_flat (bf16)
            pl.BlockSpec((K * K, HW), lambda i, p: (0, 0)),       # window masks
            pl.BlockSpec((NC, K * K * NC), lambda i, p: (0, 0)),  # conv mix weight
            pl.BlockSpec((C * HW, C * 2 * NM), lambda i, p: (0, 0)),  # FW (DFT+weights)
            pl.BlockSpec((2 * NM, HW), lambda i, p: (0, 0)),      # G (inverse DFT)
        ],
        out_specs=out_specs,
        scratch_shapes=[pltpu.VMEM((NC, 2 * NM), jnp.float32)],   # out_ft relayout only
    )

    outs = pl.pallas_call(
        kernel,
        out_shape=tuple(out_shape),
        grid_spec=grid_spec,
        compiler_params=pltpu.CompilerParams(dimension_semantics=("arbitrary",)),
    )(params, x_rows, x_flat, win_masks, mix, fw, g)

    attn = outs[0].reshape(N, C, H, W)
    if return_wave:
        return attn, outs[1].reshape(N, C, H, W)
    return attn


def reference(x, w_spatial, wspec_re, wspec_im, params, modes):
    """Pure-JAX reference (lax conv + jnp.fft) used only to validate the kernel."""
    spatial_scale, wave_scale, global_scale, beta, temp = [float(p) for p in params]
    N, C, H, W = x.shape
    K = w_spatial.shape[-1]
    pad = (K - 1) // 2
    m1 = m2 = modes

    y = lax.conv_general_dilated(x, w_spatial, (1, 1), ((pad, pad), (pad, pad)),
                                 dimension_numbers=("NCHW", "OIHW", "NCHW"))
    s = jax.nn.sigmoid(y) * spatial_scale
    sp = jax.nn.softmax(s.reshape(N, C, H * W) * temp, axis=-1).reshape(N, C, H, W)

    xf = jnp.fft.rfft2(x, axes=(-2, -1))
    wspec = wspec_re + 1j * wspec_im
    top = jnp.einsum("nikm,iokm->nokm", xf[:, :, :m1, :m2], wspec[:, :, :m1, :])
    bot = jnp.einsum("nikm,iokm->nokm", xf[:, :, H - m1:, :m2], wspec[:, :, m1:, :])
    out_ft = jnp.zeros((N, C, H, W // 2 + 1), jnp.complex64)
    out_ft = out_ft.at[:, :, :m1, :m2].set(top)
    out_ft = out_ft.at[:, :, H - m1:, :m2].set(bot)
    wave = jnp.fft.irfft2(out_ft, s=(H, W), axes=(-2, -1))

    wave_attn = jax.nn.sigmoid(wave * wave_scale)
    attn = (beta * sp + (1.0 - beta) * wave_attn) * global_scale
    return attn, wave


if __name__ == "__main__":
    key = jax.random.PRNGKey(0)
    N, C, H, W, K = 2, 4, 16, 16, 3
    modes = 4   # default 12 would overlap at 16x16; need 2*modes <= H and modes <= W//2

    k1, k2, k3, k4 = jax.random.split(key, 4)
    x = jax.random.normal(k1, (N, C, H, W), jnp.float32)
    w_spatial = jax.random.normal(k2, (C, C, K, K), jnp.float32) * (1.0 / (C * K * K)) ** 0.5
    fno_scale = 1.0 / (C * C)
    wspec_re = jax.random.normal(k3, (C, C, 2 * modes, modes), jnp.float32) * fno_scale
    wspec_im = jax.random.normal(k4, (C, C, 2 * modes, modes), jnp.float32) * fno_scale
    # Learnable scalars at their __init__ values:
    # [spatial_scale=1.0, wave_scale=0.0, global_scale=1.0, balance beta=0.5, softmax temp=1.0]
    params = jnp.array([1.0, 0.0, 1.0, 0.5, 1.0], jnp.float32)

    attn, wave = soft_wave_spatial_attention(x, w_spatial, wspec_re, wspec_im, params,
                                             modes, return_wave=True)
    jax.block_until_ready(attn)

    ref_attn, ref_wave = reference(x, w_spatial, wspec_re, wspec_im, params, modes)
    assert attn.shape == (N, C, H, W)
    assert jnp.allclose(attn, ref_attn, atol=2e-3, rtol=2e-3), \
        float(jnp.max(jnp.abs(attn - ref_attn)))
    assert jnp.allclose(wave, ref_wave, atol=5e-2, rtol=5e-2), \
        float(jnp.max(jnp.abs(wave - ref_wave)))
    print("KERNEL_OK")
</pallas_src>

<mosaic_0001>
module attributes {stable_mosaic.version = 11 : i64} {
  func.func @kernel(%arg0: i32, %arg1: memref<5xf32, #tpu.memory_space<smem>>, %arg2: memref<8x256xbf16, #tpu.memory_space<vmem>>, %arg3: memref<2x1024xbf16, #tpu.memory_space<vmem>>, %arg4: memref<9x256xf32, #tpu.memory_space<vmem>>, %arg5: memref<8x72xbf16, #tpu.memory_space<vmem>>, %arg6: memref<1024x256xbf16, #tpu.memory_space<vmem>>, %arg7: memref<64x256xbf16, #tpu.memory_space<vmem>>, %arg8: memref<8x256xf32, #tpu.memory_space<vmem>>, %arg9: memref<8x256xf32, #tpu.memory_space<vmem>>, %arg10: memref<8x64xf32, #tpu.memory_space<vmem>>) attributes {dimension_semantics = [#tpu.dimension_semantics<arbitrary>], iteration_bounds = array<i64: 1>, scalar_prefetch = 1 : i64, scratch_operands = 1 : i64, tpu.core_type = #tpu.core_type<tc>, window_params = [{pipeline_mode = #tpu.pipeline_mode<synchronous>, transform_indices = @transform_0, window_bounds = array<i64: 8, 256>}, {pipeline_mode = #tpu.pipeline_mode<synchronous>, transform_indices = @transform_1, window_bounds = array<i64: 2, 1024>}, {pipeline_mode = #tpu.pipeline_mode<synchronous>, transform_indices = @transform_2, window_bounds = array<i64: 9, 256>}, {pipeline_mode = #tpu.pipeline_mode<synchronous>, transform_indices = @transform_3, window_bounds = array<i64: 8, 72>}, {pipeline_mode = #tpu.pipeline_mode<synchronous>, transform_indices = @transform_4, window_bounds = array<i64: 1024, 256>}, {pipeline_mode = #tpu.pipeline_mode<synchronous>, transform_indices = @transform_5, window_bounds = array<i64: 64, 256>}, {pipeline_mode = #tpu.pipeline_mode<synchronous>, transform_indices = @transform_6, window_bounds = array<i64: 8, 256>}, {pipeline_mode = #tpu.pipeline_mode<synchronous>, transform_indices = @transform_7, window_bounds = array<i64: 8, 256>}]} {
    %c0 = arith.constant 0 : index
    %0 = memref.load %arg1[%c0] : memref<5xf32, #tpu.memory_space<smem>>
    %c1 = arith.constant 1 : index
    %1 = memref.load %arg1[%c1] : memref<5xf32, #tpu.memory_space<smem>>
    %c2 = arith.constant 2 : index
    %2 = memref.load %arg1[%c2] : memref<5xf32, #tpu.memory_space<smem>>
    %c3 = arith.constant 3 : index
    %3 = memref.load %arg1[%c3] : memref<5xf32, #tpu.memory_space<smem>>
    %c4 = arith.constant 4 : index
    %4 = memref.load %arg1[%c4] : memref<5xf32, #tpu.memory_space<smem>>
    %c0_0 = arith.constant 0 : index
    %c0_1 = arith.constant 0 : index
    %5 = vector.load %arg2[%c0_0, %c0_1] : memref<8x256xbf16, #tpu.memory_space<vmem>>, vector<8x256xbf16>
    %6 = arith.extf %5 : vector<8x256xbf16> to vector<8x256xf32>
    %c17_i32 = arith.constant 17 : i32
    %7 = tpu.dynamic_rotate %6 by %c17_i32 dim 1 : vector<8x256xf32>, i32 -> vector<8x256xf32>
    %c0_2 = arith.constant 0 : index
    %c0_3 = arith.constant 0 : index
    %8 = vector.load %arg4[%c0_2, %c0_3] : memref<9x256xf32, #tpu.memory_space<vmem>>, vector<1x256xf32>
    %9 = vector.broadcast %8 : vector<1x256xf32> to vector<8x256xf32>
    %10 = arith.mulf %7, %9 : vector<8x256xf32>
    %c16_i32 = arith.constant 16 : i32
    %11 = tpu.dynamic_rotate %6 by %c16_i32 dim 1 : vector<8x256xf32>, i32 -> vector<8x256xf32>
    %c1_4 = arith.constant 1 : index
    %c0_5 = arith.constant 0 : index
    %12 = vector.load %arg4[%c1_4, %c0_5] : memref<9x256xf32, #tpu.memory_space<vmem>>, vector<1x256xf32>
    %13 = vector.broadcast %12 : vector<1x256xf32> to vector<8x256xf32>
    %14 = arith.mulf %11, %13 : vector<8x256xf32>
    %c15_i32 = arith.constant 15 : i32
    %15 = tpu.dynamic_rotate %6 by %c15_i32 dim 1 : vector<8x256xf32>, i32 -> vector<8x256xf32>
    %c2_6 = arith.constant 2 : index
    %c0_7 = arith.constant 0 : index
    %16 = vector.load %arg4[%c2_6, %c0_7] : memref<9x256xf32, #tpu.memory_space<vmem>>, vector<1x256xf32>
    %17 = vector.broadcast %16 : vector<1x256xf32> to vector<8x256xf32>
    %18 = arith.mulf %15, %17 : vector<8x256xf32>
    %c1_i32 = arith.constant 1 : i32
    %19 = tpu.dynamic_rotate %6 by %c1_i32 dim 1 : vector<8x256xf32>, i32 -> vector<8x256xf32>
    %c3_8 = arith.constant 3 : index
    %c0_9 = arith.constant 0 : index
    %20 = vector.load %arg4[%c3_8, %c0_9] : memref<9x256xf32, #tpu.memory_space<vmem>>, vector<1x256xf32>
    %21 = vector.broadcast %20 : vector<1x256xf32> to vector<8x256xf32>
    %22 = arith.mulf %19, %21 : vector<8x256xf32>
    %c4_10 = arith.constant 4 : index
    %c0_11 = arith.constant 0 : index
    %23 = vector.load %arg4[%c4_10, %c0_11] : memref<9x256xf32, #tpu.memory_space<vmem>>, vector<1x256xf32>
    %24 = vector.broadcast %23 : vector<1x256xf32> to vector<8x256xf32>
    %25 = arith.mulf %6, %24 : vector<8x256xf32>
    %c255_i32 = arith.constant 255 : i32
    %26 = tpu.dynamic_rotate %6 by %c255_i32 dim 1 : vector<8x256xf32>, i32 -> vector<8x256xf32>
    %c5 = arith.constant 5 : index
    %c0_12 = arith.constant 0 : index
    %27 = vector.load %arg4[%c5, %c0_12] : memref<9x256xf32, #tpu.memory_space<vmem>>, vector<1x256xf32>
    %28 = vector.broadcast %27 : vector<1x256xf32> to vector<8x256xf32>
    %29 = arith.mulf %26, %28 : vector<8x256xf32>
    %c241_i32 = arith.constant 241 : i32
    %30 = tpu.dynamic_rotate %6 by %c241_i32 dim 1 : vector<8x256xf32>, i32 -> vector<8x256xf32>
    %c6 = arith.constant 6 : index
    %c0_13 = arith.constant 0 : index
    %31 = vector.load %arg4[%c6, %c0_13] : memref<9x256xf32, #tpu.memory_space<vmem>>, vector<1x256xf32>
    %32 = vector.broadcast %31 : vector<1x256xf32> to vector<8x256xf32>
    %33 = arith.mulf %30, %32 : vector<8x256xf32>
    %c240_i32 = arith.constant 240 : i32
    %34 = tpu.dynamic_rotate %6 by %c240_i32 dim 1 : vector<8x256xf32>, i32 -> vector<8x256xf32>
    %c7 = arith.constant 7 : index
    %c0_14 = arith.constant 0 : index
    %35 = vector.load %arg4[%c7, %c0_14] : memref<9x256xf32, #tpu.memory_space<vmem>>, vector<1x256xf32>
    %36 = vector.broadcast %35 : vector<1x256xf32> to vector<8x256xf32>
    %37 = arith.mulf %34, %36 : vector<8x256xf32>
    %c239_i32 = arith.constant 239 : i32
    %38 = tpu.dynamic_rotate %6 by %c239_i32 dim 1 : vector<8x256xf32>, i32 -> vector<8x256xf32>
    %c8 = arith.constant 8 : index
    %c0_15 = arith.constant 0 : index
    %39 = vector.load %arg4[%c8, %c0_15] : memref<9x256xf32, #tpu.memory_space<vmem>>, vector<1x256xf32>
    %40 = vector.broadcast %39 : vector<1x256xf32> to vector<8x256xf32>
    %41 = arith.mulf %38, %40 : vector<8x256xf32>
    %42 = tpu.concatenate %10, %14, %18, %22, %25, %29, %33, %37, %41 in 0 : vector<8x256xf32>, vector<8x256xf32>, vector<8x256xf32>, vector<8x256xf32>, vector<8x256xf32>, vector<8x256xf32>, vector<8x256xf32>, vector<8x256xf32>, vector<8x256xf32> -> vector<72x256xf32>
    %43 = arith.truncf %42 : vector<72x256xf32> to vector<72x256xbf16>
    %c0_16 = arith.constant 0 : index
    %c0_17 = arith.constant 0 : index
    %44 = vector.load %arg5[%c0_16, %c0_17] : memref<8x72xbf16, #tpu.memory_space<vmem>>, vector<8x72xbf16>
    %cst = arith.constant dense<0.000000e+00> : vector<8x256xf32>
    %45 = tpu.matmul %44, %43, %cst {dimension_numbers = #tpu.dot_dimension_numbers<[1], [0], [0], [1], [0, 0, 1, 1], [], []>} : vector<8x72xbf16>, vector<72x256xbf16>, vector<8x256xf32> -> vector<8x256xf32>
    %46 = arith.negf %45 : vector<8x256xf32>
    %47 = math.exp %46 : vector<8x256xf32>
    %cst_18 = arith.constant 1.000000e+00 : f32
    %48 = vector.broadcast %cst_18 : f32 to vector<8x256xf32>
    %49 = arith.addf %48, %47 : vector<8x256xf32>
    %50 = arith.divf %48, %49 : vector<8x256xf32>
    %51 = arith.mulf %0, %4 : f32
    %52 = vector.broadcast %51 : f32 to vector<8x256xf32>
    %53 = arith.mulf %50, %52 : vector<8x256xf32>
    %cst_19 = arith.constant dense<0xFF800000> : vector<8xf32>
    %54 = vector.multi_reduction <maximumf>, %53, %cst_19 [1] : vector<8x256xf32> to vector<8xf32>
    %55 = vector.shape_cast %54 : vector<8xf32> to vector<8x1xf32>
    %56 = vector.broadcast %55 : vector<8x1xf32> to vector<8x256xf32>
    %57 = arith.subf %53, %56 : vector<8x256xf32>
    %58 = math.exp %57 : vector<8x256xf32>
    %cst_20 = arith.constant dense<0.000000e+00> : vector<8xf32>
    %59 = vector.multi_reduction <add>, %58, %cst_20 [1] : vector<8x256xf32> to vector<8xf32>
    %60 = vector.shape_cast %59 : vector<8xf32> to vector<8x1xf32>
    %61 = tpu.reciprocal %60 {approx = true} : vector<8x1xf32> -> vector<8x1xf32>
    %62 = vector.broadcast %61 : vector<8x1xf32> to vector<8x256xf32>
    %63 = arith.mulf %58, %62 : vector<8x256xf32>
    %c0_21 = arith.constant 0 : index
    %c0_22 = arith.constant 0 : index
    %64 = vector.load %arg3[%c0_21, %c0_22] : memref<2x1024xbf16, #tpu.memory_space<vmem>>, vector<2x1024xbf16>
    %c0_23 = arith.constant 0 : index
    %c0_24 = arith.constant 0 : index
    %65 = vector.load %arg6[%c0_23, %c0_24] : memref<1024x256xbf16, #tpu.memory_space<vmem>>, vector<1024x256xbf16>
    %cst_25 = arith.constant dense<0.000000e+00> : vector<2x256xf32>
    %66 = tpu.matmul %64, %65, %cst_25 {dimension_numbers = #tpu.dot_dimension_numbers<[1], [0], [0], [1], [0, 0, 1, 1], [], []>} : vector<2x1024xbf16>, vector<1024x256xbf16>, vector<2x256xf32> -> vector<2x256xf32>
    %67 = vector.extract_strided_slice %66 {offsets = [0, 0], sizes = [1, 64], strides = [1, 1]} : vector<2x256xf32> to vector<1x64xf32>
    %c0_26 = arith.constant 0 : index
    %c0_27 = arith.constant 0 : index
    %68 = vector.load %arg10[%c0_26, %c0_27] : memref<8x64xf32, #tpu.memory_space<vmem>>, vector<1x64xf32>
    tpu.vector_store %arg10[%c0_26, %c0_27], %67 {strides = array<i32>} : memref<8x64xf32, #tpu.memory_space<vmem>>, vector<1x64xf32>,
    %69 = vector.extract_strided_slice %66 {offsets = [0, 64], sizes = [1, 64], strides = [1, 1]} : vector<2x256xf32> to vector<1x64xf32>
    %c1_28 = arith.constant 1 : index
    %c0_29 = arith.constant 0 : index
    %70 = vector.load %arg10[%c1_28, %c0_29] : memref<8x64xf32, #tpu.memory_space<vmem>>, vector<1x64xf32>
    tpu.vector_store %arg10[%c1_28, %c0_29], %69 {strides = array<i32>} : memref<8x64xf32, #tpu.memory_space<vmem>>, vector<1x64xf32>,
    %71 = vector.extract_strided_slice %66 {offsets = [0, 128], sizes = [1, 64], strides = [1, 1]} : vector<2x256xf32> to vector<1x64xf32>
    %c2_30 = arith.constant 2 : index
    %c0_31 = arith.constant 0 : index
    %72 = vector.load %arg10[%c2_30, %c0_31] : memref<8x64xf32, #tpu.memory_space<vmem>>, vector<1x64xf32>
    tpu.vector_store %arg10[%c2_30, %c0_31], %71 {strides = array<i32>} : memref<8x64xf32, #tpu.memory_space<vmem>>, vector<1x64xf32>,
    %73 = vector.extract_strided_slice %66 {offsets = [0, 192], sizes = [1, 64], strides = [1, 1]} : vector<2x256xf32> to vector<1x64xf32>
    %c3_32 = arith.constant 3 : index
    %c0_33 = arith.constant 0 : index
    %74 = vector.load %arg10[%c3_32, %c0_33] : memref<8x64xf32, #tpu.memory_space<vmem>>, vector<1x64xf32>
    tpu.vector_store %arg10[%c3_32, %c0_33], %73 {strides = array<i32>} : memref<8x64xf32, #tpu.memory_space<vmem>>, vector<1x64xf32>,
    %75 = vector.extract_strided_slice %66 {offsets = [1, 0], sizes = [1, 64], strides = [1, 1]} : vector<2x256xf32> to vector<1x64xf32>
    %c4_34 = arith.constant 4 : index
    %c0_35 = arith.constant 0 : index
    %76 = vector.load %arg10[%c4_34, %c0_35] : memref<8x64xf32, #tpu.memory_space<vmem>>, vector<1x64xf32>
    tpu.vector_store %arg10[%c4_34, %c0_35], %75 {strides = array<i32>} : memref<8x64xf32, #tpu.memory_space<vmem>>, vector<1x64xf32>,
    %77 = vector.extract_strided_slice %66 {offsets = [1, 64], sizes = [1, 64], strides = [1, 1]} : vector<2x256xf32> to vector<1x64xf32>
    %c5_36 = arith.constant 5 : index
    %c0_37 = arith.constant 0 : index
    %78 = vector.load %arg10[%c5_36, %c0_37] : memref<8x64xf32, #tpu.memory_space<vmem>>, vector<1x64xf32>
    tpu.vector_store %arg10[%c5_36, %c0_37], %77 {strides = array<i32>} : memref<8x64xf32, #tpu.memory_space<vmem>>, vector<1x64xf32>,
    %79 = vector.extract_strided_slice %66 {offsets = [1, 128], sizes = [1, 64], strides = [1, 1]} : vector<2x256xf32> to vector<1x64xf32>
    %c6_38 = arith.constant 6 : index
    %c0_39 = arith.constant 0 : index
    %80 = vector.load %arg10[%c6_38, %c0_39] : memref<8x64xf32, #tpu.memory_space<vmem>>, vector<1x64xf32>
    tpu.vector_store %arg10[%c6_38, %c0_39], %79 {strides = array<i32>} : memref<8x64xf32, #tpu.memory_space<vmem>>, vector<1x64xf32>,
    %81 = vector.extract_strided_slice %66 {offsets = [1, 192], sizes = [1, 64], strides = [1, 1]} : vector<2x256xf32> to vector<1x64xf32>
    %c7_40 = arith.constant 7 : index
    %c0_41 = arith.constant 0 : index
    %82 = vector.load %arg10[%c7_40, %c0_41] : memref<8x64xf32, #tpu.memory_space<vmem>>, vector<1x64xf32>
    tpu.vector_store %arg10[%c7_40, %c0_41], %81 {strides = array<i32>} : memref<8x64xf32, #tpu.memory_space<vmem>>, vector<1x64xf32>,
    %c0_42 = arith.constant 0 : index
    %c0_43 = arith.constant 0 : index
    %83 = vector.load %arg10[%c0_42, %c0_43] : memref<8x64xf32, #tpu.memory_space<vmem>>, vector<8x64xf32>
    %84 = arith.truncf %83 : vector<8x64xf32> to vector<8x64xbf16>
    %c0_44 = arith.constant 0 : index
    %c0_45 = arith.constant 0 : index
    %85 = vector.load %arg7[%c0_44, %c0_45] : memref<64x256xbf16, #tpu.memory_space<vmem>>, vector<64x256xbf16>
    %cst_46 = arith.constant dense<0.000000e+00> : vector<8x256xf32>
    %86 = tpu.matmul %84, %85, %cst_46 {dimension_numbers = #tpu.dot_dimension_numbers<[1], [0], [0], [1], [0, 0, 1, 1], [], []>} : vector<8x64xbf16>, vector<64x256xbf16>, vector<8x256xf32> -> vector<8x256xf32>
    %87 = vector.broadcast %1 : f32 to vector<8x256xf32>
    %88 = arith.mulf %86, %87 : vector<8x256xf32>
    %89 = arith.negf %88 : vector<8x256xf32>
    %90 = math.exp %89 : vector<8x256xf32>
    %cst_47 = arith.constant 1.000000e+00 : f32
    %91 = vector.broadcast %cst_47 : f32 to vector<8x256xf32>
    %92 = arith.addf %91, %90 : vector<8x256xf32>
    %93 = arith.divf %91, %92 : vector<8x256xf32>
    %94 = vector.broadcast %3 : f32 to vector<8x256xf32>
    %95 = arith.mulf %94, %63 : vector<8x256xf32>
    %cst_48 = arith.constant 1.000000e+00 : f32
    %96 = arith.subf %cst_48, %3 : f32
    %97 = vector.broadcast %96 : f32 to vector<8x256xf32>
    %98 = arith.mulf %97, %93 : vector<8x256xf32>
    %99 = arith.addf %95, %98 : vector<8x256xf32>
    %100 = vector.broadcast %2 : f32 to vector<8x256xf32>
    %101 = arith.mulf %99, %100 : vector<8x256xf32>
    %c0_49 = arith.constant 0 : index
    %c0_50 = arith.constant 0 : index
    %102 = vector.load %arg8[%c0_49, %c0_50] : memref<8x256xf32, #tpu.memory_space<vmem>>, vector<8x256xf32>
    tpu.vector_store %arg8[%c0_49, %c0_50], %101 {strides = array<i32>} : memref<8x256xf32, #tpu.memory_space<vmem>>, vector<8x256xf32>,
    %c0_51 = arith.constant 0 : index
    %c0_52 = arith.constant 0 : index
    %103 = vector.load %arg9[%c0_51, %c0_52] : memref<8x256xf32, #tpu.memory_space<vmem>>, vector<8x256xf32>
    tpu.vector_store %arg9[%c0_51, %c0_52], %86 {strides = array<i32>} : memref<8x256xf32, #tpu.memory_space<vmem>>, vector<8x256xf32>,
    return
  }
  func.func @transform_0(%arg0: i32, %arg1: memref<5xf32, #tpu.memory_space<smem>>) -> (i32, i32) {
    %c0_i32 = arith.constant 0 : i32
    %c0_i32_0 = arith.constant 0 : i32
    %c0_i32_1 = arith.constant 0 : i32
    return %c0_i32, %c0_i32_0 : i32, i32
  }
  func.func @transform_1(%arg0: i32, %arg1: memref<5xf32, #tpu.memory_space<smem>>) -> (i32, i32) {
    %c0_i32 = arith.constant 0 : i32
    %c0_i32_0 = arith.constant 0 : i32
    %c0_i32_1 = arith.constant 0 : i32
    return %c0_i32, %c0_i32_0 : i32, i32
  }
  func.func @transform_2(%arg0: i32, %arg1: memref<5xf32, #tpu.memory_space<smem>>) -> (i32, i32) {
    %c0_i32 = arith.constant 0 : i32
    %c0_i32_0 = arith.constant 0 : i32
    %c0_i32_1 = arith.constant 0 : i32
    return %c0_i32, %c0_i32_0 : i32, i32
  }
  func.func @transform_3(%arg0: i32, %arg1: memref<5xf32, #tpu.memory_space<smem>>) -> (i32, i32) {
    %c0_i32 = arith.constant 0 : i32
    %c0_i32_0 = arith.constant 0 : i32
    %c0_i32_1 = arith.constant 0 : i32
    return %c0_i32, %c0_i32_0 : i32, i32
  }
  func.func @transform_4(%arg0: i32, %arg1: memref<5xf32, #tpu.memory_space<smem>>) -> (i32, i32) {
    %c0_i32 = arith.constant 0 : i32
    %c0_i32_0 = arith.constant 0 : i32
    %c0_i32_1 = arith.constant 0 : i32
    return %c0_i32, %c0_i32_0 : i32, i32
  }
  func.func @transform_5(%arg0: i32, %arg1: memref<5xf32, #tpu.memory_space<smem>>) -> (i32, i32) {
    %c0_i32 = arith.constant 0 : i32
    %c0_i32_0 = arith.constant 0 : i32
    %c0_i32_1 = arith.constant 0 : i32
    return %c0_i32, %c0_i32_0 : i32, i32
  }
  func.func @transform_6(%arg0: i32, %arg1: memref<5xf32, #tpu.memory_space<smem>>) -> (i32, i32) {
    %c0_i32 = arith.constant 0 : i32
    %c0_i32_0 = arith.constant 0 : i32
    %c0_i32_1 = arith.constant 0 : i32
    return %c0_i32, %c0_i32_0 : i32, i32
  }
  func.func @transform_7(%arg0: i32, %arg1: memref<5xf32, #tpu.memory_space<smem>>) -> (i32, i32) {
    %c0_i32 = arith.constant 0 : i32
    %c0_i32_0 = arith.constant 0 : i32
    %c0_i32_1 = arith.constant 0 : i32
    return %c0_i32, %c0_i32_0 : i32, i32
  }
}

</mosaic_0001>

<llo_original>
// kernel: tpu_custom_call.1
$region0: #{tpu_custom_call.1}
  #allocation0 [shape = 'u32[]', space=smem, size = 0x4, offset = 0x4, fixed_abs, tag = 'smem constant byte address 0x4 - core index']
  #allocation1 [shape = 'u32[144,128]{1,0:T(1,128)}', space=vmem, size = 0x12000, scoped, tag = 'internal scratch']
  #allocation2 [shape = 'f32[8,64]{1,0:T(8,128)}', space=vmem, size = 0x1000, scoped, tag = 'scratch operand']
  #allocation3 [shape = 's32[1]{0}', space=sflag, size = 0x4, scoped, tag = 'scoped memory for tpu_custom_call.1']
  #allocation4 [shape = 'u8[512]{0}', space=smem, size = 0x200, scoped, tag = 'prefetched SMEM operand 0']
  %s0 = inlined_call_operand.hbm [shape: f32[5], index: 0, kind: input, shape index: {}]
  %s1 = inlined_call_operand.hbm [shape: bf16[8,256], index: 1, kind: input, shape index: {}]
  %s2 = inlined_call_operand.hbm [shape: bf16[2,1024], index: 2, kind: input, shape index: {}]
  %s3 = inlined_call_operand.hbm [shape: f32[9,256], index: 3, kind: input, shape index: {}]
  %s4 = inlined_call_operand.vmem [shape: bf16[8,72], index: 4, kind: input, shape index: {}]
  %s5 = inlined_call_operand.hbm [shape: bf16[1024,256], index: 5, kind: input, shape index: {}]
  %s6 = inlined_call_operand.hbm [shape: bf16[64,256], index: 6, kind: input, shape index: {}]
  %s7 = inlined_call_operand.hbm [shape: f32[8,256], index: 7, kind: output, shape index: {0}]
  %s8 = inlined_call_operand.hbm [shape: f32[8,256], index: 8, kind: output, shape index: {1}]
  %9 = xla_tuple %s7, %s8
  %s10 = sld [smem:[#allocation0]]
  $region62: #{tpu_custom_call.1} parent=0
    _
  %s12 = ssub.s32 1, %s10
  %s13 = scalar_select 0, %s12, %s10
  %15 = dma.hbm_to_smem %s0, 16, [#allocation4], [#allocation3]
  %16 = dma.done [#allocation3], 16
  %17 = sfence
  $region1: #{tpu_custom_call.1} parent=0
    #allocation5 [shape = 'u8[4096]{0}', space=vmem, size = 0x1000, scoped, tag = 'input window, operand 1, single buffered']
    #allocation6 [shape = 's32[1]{0}', space=sflag, size = 0x4, scoped, tag = 'scoped memory for tpu_custom_call.1']
    #allocation7 [shape = 's32[1]{0}', space=sflag, size = 0x4, scoped, tag = 'scoped memory for tpu_custom_call.1']
    #allocation8 [shape = 'u8[4096]{0}', space=vmem, size = 0x1000, scoped, tag = 'input window, operand 2, single buffered']
    #allocation9 [shape = 's32[1]{0}', space=sflag, size = 0x4, scoped, tag = 'scoped memory for tpu_custom_call.1']
    #allocation10 [shape = 'u8[16384]{0}', space=vmem, size = 0x4000, scoped, tag = 'input window, operand 3, single buffered']
    #allocation11 [shape = 'u8[524288]{0}', space=vmem, size = 0x80000, scoped, tag = 'input window, operand 5, single buffered']
    #allocation12 [shape = 's32[1]{0}', space=sflag, size = 0x4, scoped, tag = 'scoped memory for tpu_custom_call.1']
    #allocation13 [shape = 'u8[32768]{0}', space=vmem, size = 0x8000, scoped, tag = 'input window, operand 6, single buffered']
    #allocation14 [shape = 'u8[8192]{0}', space=vmem, size = 0x2000, scoped, tag = 'output window, operand 0, single buffered']
    #allocation15 [shape = 'u8[8192]{0}', space=vmem, size = 0x2000, scoped, tag = 'output window, operand 1, single buffered']
    #allocation16 [shape = 's32[1]{0}', space=sflag, size = 0x4, scoped, tag = 'scoped memory for tpu_custom_call.1']
    %18 = vsyncpa [#allocation6], 0
    %19 = vsyncpa [#allocation9], 0
    %20 = vsyncpa [#allocation12], 0
    %21 = vsyncpa [#allocation7], 0
    %22 = vsyncpa [#allocation16], 0
    // Predicated region
    $region2: #{tpu_custom_call.1} parent=1 // pred_check
      _
    $region3: #{tpu_custom_call.1} parent=1 // pred_check_branch
      %24 = sbr.rel (0) target = $region5
    $region4: #{tpu_custom_call.1} parent=1 // pred_region
      %s26 = ssub.s32 128, 128
      %27 = vsyncadd [#allocation6], %s26
      %s29 = sshll.u32 [#allocation5], 4
      %s30 = int_to_ptr.vmem [resolvable:$true] %s29
      %32 = dma.hbm_to_vmem [thread:$0]  %s1, 128, %s30, [#allocation6]
    $region5: #{tpu_custom_call.1} parent=1 // pred_fallthru
      _
    // Predicated region
    $region6: #{tpu_custom_call.1} parent=1 // pred_check
      _
    $region7: #{tpu_custom_call.1} parent=1 // pred_check_branch
      %34 = sbr.rel (0) target = $region9
    $region8: #{tpu_custom_call.1} parent=1 // pred_region
      %s36 = ssub.s32 128, 128
      %37 = vsyncadd [#allocation9], %s36
      %s39 = sshll.u32 [#allocation8], 4
      %s40 = int_to_ptr.vmem [resolvable:$true] %s39
      %42 = dma.hbm_to_vmem [thread:$0]  %s2, 128, %s40, [#allocation9]
    $region9: #{tpu_custom_call.1} parent=1 // pred_fallthru
      _
    // Predicated region
    $region10: #{tpu_custom_call.1} parent=1 // pred_check
      _
    $region11: #{tpu_custom_call.1} parent=1 // pred_check_branch
      %44 = sbr.rel (0) target = $region13
    $region12: #{tpu_custom_call.1} parent=1 // pred_region
      %s46 = ssub.s32 512, 512
      %47 = vsyncadd [#allocation9], %s46
      %s48 = sshll.u32 [#allocation10], 4
      %s49 = int_to_ptr.vmem [resolvable:$true] %s48
      %54 = dma.hbm_to_vmem [thread:$0]  %s3, 512, %s49, [#allocation9], 256, 256, 16
    $region13: #{tpu_custom_call.1} parent=1 // pred_fallthru
      _
    // Predicated region
    $region14: #{tpu_custom_call.1} parent=1 // pred_check
      _
    $region15: #{tpu_custom_call.1} parent=1 // pred_check_branch
      %56 = sbr.rel (0) target = $region17
    $region16: #{tpu_custom_call.1} parent=1 // pred_region
      _
    $region17: #{tpu_custom_call.1} parent=1 // pred_fallthru
      _
    // Predicated region
    $region18: #{tpu_custom_call.1} parent=1 // pred_check
      _
    $region19: #{tpu_custom_call.1} parent=1 // pred_check_branch
      %58 = sbr.rel (0) target = $region21
    $region20: #{tpu_custom_call.1} parent=1 // pred_region
      %s60 = ssub.s32 16384, 16384
      %61 = vsyncadd [#allocation12], %s60
      %s62 = sshll.u32 [#allocation11], 4
      %s63 = int_to_ptr.vmem [resolvable:$true] %s62
      %68 = dma.hbm_to_vmem [thread:$0]  %s5, 16384, %s63, [#allocation12], 128, 128, 8
    $region21: #{tpu_custom_call.1} parent=1 // pred_fallthru
      _
    // Predicated region
    $region22: #{tpu_custom_call.1} parent=1 // pred_check
      _
    $region23: #{tpu_custom_call.1} parent=1 // pred_check_branch
      %70 = sbr.rel (0) target = $region25
    $region24: #{tpu_custom_call.1} parent=1 // pred_region
      %s72 = ssub.s32 1024, 1024
      %73 = vsyncadd [#allocation12], %s72
      %s74 = sshll.u32 [#allocation13], 4
      %s75 = int_to_ptr.vmem [resolvable:$true] %s74
      %80 = dma.hbm_to_vmem [thread:$0]  %s6, 1024, %s75, [#allocation12], 128, 128, 8
    $region25: #{tpu_custom_call.1} parent=1 // pred_fallthru
      _
    // Predicated region
    $region26: #{tpu_custom_call.1} parent=1 // pred_check
      _
    $region27: #{tpu_custom_call.1} parent=1 // pred_check_branch
      %82 = sbr.rel (0) target = $region29
    $region28: #{tpu_custom_call.1} parent=1 // pred_region
      %83 = dma.done [#allocation6], 128
    $region29: #{tpu_custom_call.1} parent=1 // pred_fallthru
      _
    // Predicated region
    $region30: #{tpu_custom_call.1} parent=1 // pred_check
      _
    $region31: #{tpu_custom_call.1} parent=1 // pred_check_branch
      %85 = sbr.rel (0) target = $region33
    $region32: #{tpu_custom_call.1} parent=1 // pred_region
      %86 = dma.done [#allocation9], 128
    $region33: #{tpu_custom_call.1} parent=1 // pred_fallthru
      _
    // Predicated region
    $region34: #{tpu_custom_call.1} parent=1 // pred_check
      _
    $region35: #{tpu_custom_call.1} parent=1 // pred_check_branch
      %88 = sbr.rel (0) target = $region37
    $region36: #{tpu_custom_call.1} parent=1 // pred_region
      %89 = dma.done [#allocation9], 512
    $region37: #{tpu_custom_call.1} parent=1 // pred_fallthru
      _
    // Predicated region
    $region38: #{tpu_custom_call.1} parent=1 // pred_check
      _
    $region39: #{tpu_custom_call.1} parent=1 // pred_check_branch
      %91 = sbr.rel (0) target = $region41
    $region40: #{tpu_custom_call.1} parent=1 // pred_region
      %92 = dma.done [#allocation12], 16384
    $region41: #{tpu_custom_call.1} parent=1 // pred_fallthru
      _
    // Predicated region
    $region42: #{tpu_custom_call.1} parent=1 // pred_check
      _
    $region43: #{tpu_custom_call.1} parent=1 // pred_check_branch
      %94 = sbr.rel (0) target = $region45
    $region44: #{tpu_custom_call.1} parent=1 // pred_region
      %95 = dma.done [#allocation12], 1024
    $region45: #{tpu_custom_call.1} parent=1 // pred_fallthru
      _
    %s97 = sld [smem:[#allocation4]]
    %s98 = sld [smem:[#allocation4 + $0x1]]
    %s99 = sld [smem:[#allocation4 + $0x2]]
    %s100 = sld [smem:[#allocation4 + $0x3]]
    %s101 = sld [smem:[#allocation4 + $0x4]]
    %v102 = vld [vmem:[#allocation5] sm:$0xff]
    %v103 = vunpack.c.l.bf16 %v102
    %v104 = vunpack.c.h.bf16 %v102
    %105 = vrot.lane.b32.xlu0 %v103, 17
    %v106 = vpop.permute.xlu0 %105
    %107 = vrot.lane.b32.xlu0 %v104, 17
    %v108 = vpop.permute.xlu0 %107
    %v109 = vlaneseq
    %v110 = vand.u32 %v109, 127
    %vm111 = vcmp.lt.s32.totalorder %v110, 17
    %v112 = vsel %vm111, %v106, %v108
    %v113 = vsel %vm111, %v108, %v106
    %v114 = vld [vmem:[#allocation10] ss:$8 sm:$0x3]
    %v116 = vlaneseq
    %v117 = vshrl.u32 %v116, 7
    %v118 = vsub.s32 0, %v117
    %v119 = vrot.slane %v114, %v118
    %v120 = vlaneseq
    %v121 = vshrl.u32 %v120, 7
    %v122 = vsub.s32 1, %v121
    %v123 = vrot.slane %v114, %v122
    %v126 = vmul.f32 %v113, %v119
    %v127 = vmul.f32 %v112, %v123
    %128 = vrot.lane.b32.xlu0 %v103, 16
    %v129 = vpop.permute.xlu0 %128
    %130 = vrot.lane.b32.xlu0 %v104, 16
    %v131 = vpop.permute.xlu0 %130
    %vm132 = vcmp.lt.s32.totalorder %v110, 16
    %v133 = vsel %vm132, %v129, %v131
    %v134 = vsel %vm132, %v131, %v129
    %s135 = scalar_lea.vmem [#allocation10], 1
    %v136 = vld [vmem:[%s135] ss:$8 sm:$0x3]
    %v138 = vlaneseq
    %v139 = vshrl.u32 %v138, 7
    %v140 = vsub.s32 0, %v139
    %v141 = vrot.slane %v136, %v140
    %v142 = vlaneseq
    %v143 = vshrl.u32 %v142, 7
    %v144 = vsub.s32 1, %v143
    %v145 = vrot.slane %v136, %v144
    %v148 = vmul.f32 %v134, %v141
    %v149 = vmul.f32 %v133, %v145
    %150 = vrot.lane.b32.xlu0 %v103, 15
    %v151 = vpop.permute.xlu0 %150
    %152 = vrot.lane.b32.xlu0 %v104, 15
    %v153 = vpop.permute.xlu0 %152
    %vm154 = vcmp.lt.s32.totalorder %v110, 15
    %v155 = vsel %vm154, %v151, %v153
    %v156 = vsel %vm154, %v153, %v151
    %s157 = scalar_lea.vmem [#allocation10], 2
    %v158 = vld [vmem:[%s157] ss:$8 sm:$0x3]
    %v160 = vlaneseq
    %v161 = vshrl.u32 %v160, 7
    %v162 = vsub.s32 0, %v161
    %v163 = vrot.slane %v158, %v162
    %v164 = vlaneseq
    %v165 = vshrl.u32 %v164, 7
    %v166 = vsub.s32 1, %v165
    %v167 = vrot.slane %v158, %v166
    %v170 = vmul.f32 %v156, %v163
    %v171 = vmul.f32 %v155, %v167
    %172 = vrot.lane.b32.xlu0 %v103, 1
    %v173 = vpop.permute.xlu0 %172
    %174 = vrot.lane.b32.xlu0 %v104, 1
    %v175 = vpop.permute.xlu0 %174
    %vm176 = vcmp.lt.s32.totalorder %v110, 1
    %v177 = vsel %vm176, %v173, %v175
    %v178 = vsel %vm176, %v175, %v173
    %s179 = scalar_lea.vmem [#allocation10], 3
    %v180 = vld [vmem:[%s179] ss:$8 sm:$0x3]
    %v182 = vlaneseq
    %v183 = vshrl.u32 %v182, 7
    %v184 = vsub.s32 0, %v183
    %v185 = vrot.slane %v180, %v184
    %v186 = vlaneseq
    %v187 = vshrl.u32 %v186, 7
    %v188 = vsub.s32 1, %v187
    %v189 = vrot.slane %v180, %v188
    %v192 = vmul.f32 %v178, %v185
    %v193 = vmul.f32 %v177, %v189
    %s194 = scalar_lea.vmem [#allocation10], 4
    %v195 = vld [vmem:[%s194] ss:$8 sm:$0x3]
    %v197 = vlaneseq
    %v198 = vshrl.u32 %v197, 7
    %v199 = vsub.s32 0, %v198
    %v200 = vrot.slane %v195, %v199
    %v201 = vlaneseq
    %v202 = vshrl.u32 %v201, 7
    %v203 = vsub.s32 1, %v202
    %v204 = vrot.slane %v195, %v203
    %v207 = vmul.f32 %v103, %v200
    %v208 = vmul.f32 %v104, %v204
    %209 = vrot.lane.b32.xlu0 %v103, 127
    %v210 = vpop.permute.xlu0 %209
    %211 = vrot.lane.b32.xlu0 %v104, 127
    %v212 = vpop.permute.xlu0 %211
    %vm213 = vcmp.lt.s32.totalorder %v110, 127
    %v214 = vsel %vm213, %v210, %v212
    %v215 = vsel %vm213, %v212, %v210
    %s216 = scalar_lea.vmem [#allocation10], 5
    %v217 = vld [vmem:[%s216] ss:$8 sm:$0x3]
    %v219 = vlaneseq
    %v220 = vshrl.u32 %v219, 7
    %v221 = vsub.s32 0, %v220
    %v222 = vrot.slane %v217, %v221
    %v223 = vlaneseq
    %v224 = vshrl.u32 %v223, 7
    %v225 = vsub.s32 1, %v224
    %v226 = vrot.slane %v217, %v225
    %v229 = vmul.f32 %v214, %v222
    %v230 = vmul.f32 %v215, %v226
    %231 = vrot.lane.b32.xlu0 %v103, 113
    %v232 = vpop.permute.xlu0 %231
    %233 = vrot.lane.b32.xlu0 %v104, 113
    %v234 = vpop.permute.xlu0 %233
    %vm235 = vcmp.lt.s32.totalorder %v110, 113
    %v236 = vsel %vm235, %v232, %v234
    %v237 = vsel %vm235, %v234, %v232
    %s238 = scalar_lea.vmem [#allocation10], 6
    %v239 = vld [vmem:[%s238] ss:$8 sm:$0x3]
    %v241 = vlaneseq
    %v242 = vshrl.u32 %v241, 7
    %v243 = vsub.s32 0, %v242
    %v244 = vrot.slane %v239, %v243
    %v245 = vlaneseq
    %v246 = vshrl.u32 %v245, 7
    %v247 = vsub.s32 1, %v246
    %v248 = vrot.slane %v239, %v247
    %v251 = vmul.f32 %v236, %v244
    %v252 = vmul.f32 %v237, %v248
    %253 = vrot.lane.b32.xlu0 %v103, 112
    %v254 = vpop.permute.xlu0 %253
    %255 = vrot.lane.b32.xlu0 %v104, 112
    %v256 = vpop.permute.xlu0 %255
    %vm257 = vcmp.lt.s32.totalorder %v110, 112
    %v258 = vsel %vm257, %v254, %v256
    %v259 = vsel %vm257, %v256, %v254
    %s260 = scalar_lea.vmem [#allocation10], 7
    %v261 = vld [vmem:[%s260] ss:$8 sm:$0x3]
    %v263 = vlaneseq
    %v264 = vshrl.u32 %v263, 7
    %v265 = vsub.s32 0, %v264
    %v266 = vrot.slane %v261, %v265
    %v267 = vlaneseq
    %v268 = vshrl.u32 %v267, 7
    %v269 = vsub.s32 1, %v268
    %v270 = vrot.slane %v261, %v269
    %v273 = vmul.f32 %v258, %v266
    %v274 = vmul.f32 %v259, %v270
    %275 = vrot.lane.b32.xlu0 %v103, 111
    %v276 = vpop.permute.xlu0 %275
    %277 = vrot.lane.b32.xlu0 %v104, 111
    %v278 = vpop.permute.xlu0 %277
    %vm279 = vcmp.lt.s32.totalorder %v110, 111
    %v280 = vsel %vm279, %v276, %v278
    %v281 = vsel %vm279, %v278, %v276
    %s282 = scalar_lea.vmem [#allocation10], 16
    %v283 = vld [vmem:[%s282] ss:$8 sm:$0x3]
    %v285 = vlaneseq
    %v286 = vshrl.u32 %v285, 7
    %v287 = vsub.s32 0, %v286
    %v288 = vrot.slane %v283, %v287
    %v289 = vlaneseq
    %v290 = vshrl.u32 %v289, 7
    %v291 = vsub.s32 1, %v290
    %v292 = vrot.slane %v283, %v291
    %v295 = vmul.f32 %v280, %v288
    %v296 = vmul.f32 %v281, %v292
    %v297 = vpack.c.bf16 %v148, %v126
    %v298 = vpack.c.bf16 %v149, %v127
    %v299 = vpack.c.bf16 %v192, %v170
    %v300 = vpack.c.bf16 %v193, %v171
    %v301 = vpack.c.bf16 %v229, %v207
    %v302 = vpack.c.bf16 %v230, %v208
    %v303 = vpack.c.bf16 %v273, %v251
    %v304 = vpack.c.bf16 %v274, %v252
    %v305 = vpack.c.bf16 %v295, %v295
    %v306 = vpack.c.bf16 %v296, %v296
    %v307 = vld [vmem:[%s4] sm:$0xf]
    %vm308 = vcmask 588800
    %v310 = vsel %vm308, %v307, 0
    %vm312 = vcmask 1043456
    %v314 = vsel %vm312, %v305, 0
    %v317 = vsel %vm312, %v306, 0
    %319 = vmatprep.subr.bf16.mxu0 %v298
    %320 = vmatpush1.bf16.msra.mxu0 %v297
    %321 = vmatprep.subr.bf16.mxu0 %v300
    %322 = vmatpush1.bf16.msra.mxu0 %v299
    %323 = vmatprep.subr.bf16.mxu0 %v302
    %324 = vmatpush1.bf16.msra.mxu0 %v301
    %325 = vmatprep.subr.bf16.mxu0 %v304
    %326 = vmatpush1.bf16.msra.mxu0 %v303
    %327 = vmatprep.subr.bf16.mxu0 %v317
    %328 = vmatpush1.bf16.msra.mxu0 %v314
    %329 = vmatprep.subr.bf16.mxu0 0
    %330 = vmatpush1.bf16.msra.mxu0 0
    %331 = vmatprep.subr.bf16.mxu0 0
    %332 = vmatpush1.bf16.msra.mxu0 0
    %333 = vmatprep.subr.bf16.mxu0 0
    %334 = vmatpush1.bf16.msra.mxu0 0
    %335 = vmatprep.subr.bf16.mxu0 0
    %336 = vmatpush1.bf16.msra.mxu0 0
    %337 = vmatprep.subr.bf16.mxu0 0
    %338 = vmatpush1.bf16.msra.mxu0 0
    %339 = vmatprep.subr.bf16.mxu0 0
    %340 = vmatpush1.bf16.msra.mxu0 0
    %341 = vmatprep.subr.bf16.mxu0 0
    %342 = vmatpush1.bf16.msra.mxu0 0
    %343 = vmatprep.subr.bf16.mxu0 0
    %344 = vmatpush1.bf16.msra.mxu0 0
    %345 = vmatprep.subr.bf16.mxu0 0
    %346 = vmatpush1.bf16.msra.mxu0 0
    %347 = vmatprep.subr.bf16.mxu0 0
    %348 = vmatpush1.bf16.msra.mxu0 0
    %349 = vmatprep.subr.bf16.mxu0 0
    %350 = vmatpush1.bf16.msra.mxu0 0
    %351 = vmatprep.mubr.bf16.mxu0 0
    %352 = vmatmul.mubr.bf16.gmra.mrb[0].mxu0 %v310
    %v353 = vpop.f32.mrb[0].mxu0
    %v354 = vadd.f32 0.0, %v353
    %v355 = vpop.f32.mrb[0].mxu0
    %v356 = vadd.f32 0.0, %v355
    %v357 = vpop.f32.mrb[0].mxu0
    %v358 = vpop.f32.mrb[0].mxu0
    %359 = vdwg.mxu0
    %v360 = vxor.u32 %v354, 2147483648
    %v361 = vxor.u32 %v356, 2147483648
    %v362 = vmul.f32 %v360, 1.442695
    %v363 = vpow.pop %v362
    %v364 = vmul.f32 %v361, 1.442695
    %v365 = vpow.pop %v364
    %v366 = vadd.f32 %v363, 1.0
    %v367 = vadd.f32 %v365, 1.0
    %v368 = vrcp.pop %v366
    %v369 = vmul.f32 1.0, %v368
    %v370 = vrcp.pop %v367
    %v371 = vmul.f32 1.0, %v370
    %s372 = smul.f32 %s97, %s101
    %v373 = vstv %s372
    %v374 = vmul.f32 %v369, %v373
    %v375 = vmul.f32 %v371, %v373
    %v376 = vmax.f32 %v374, %v375
    %377 = vmax.xlane.f32.xlu0 %v376
    %v378 = vpop.xlane.xlu0 %377
    %v379 = vsub.f32 %v374, %v378
    %v380 = vsub.f32 %v375, %v378
    %v381 = vmul.f32 %v379, 1.442695
    %v382 = vpow.pop %v381
    %v383 = vmul.f32 %v380, 1.442695
    %v384 = vpow.pop %v383
    %v385 = vadd.f32 %v382, %v384
    %386 = vadd.xlane.f32.xlu0 %v385
    %v387 = vpop.xlane.xlu0 %386
    %v388 = vrcp.pop %v387
    %v389 = vmul.f32 %v382, %v388
    %v390 = vmul.f32 %v384, %v388
    %v391 = vld [vmem:[#allocation8] sm:$0xff]
    %v392 = vld [vmem:[#allocation11] sm:$0xff]
    %v393 = vld [vmem:[#allocation11 + $0x8] sm:$0xff]
    %v394 = vld [vmem:[#allocation11 + $0x10] sm:$0xff]
    %v395 = vld [vmem:[#allocation11 + $0x18] sm:$0xff]
    %v396 = vld [vmem:[#allocation11 + $0x20] sm:$0xff]
    %v397 = vld [vmem:[#allocation11 + $0x28] sm:$0xff]
    %v398 = vld [vmem:[#allocation11 + $0x30] sm:$0xff]
    %v399 = vld [vmem:[#allocation11 + $0x38] sm:$0xff]
    %v400 = vld [vmem:[#allocation11 + $0x40] sm:$0xff]
    %v401 = vld [vmem:[#allocation11 + $0x48] sm:$0xff]
    %v402 = vld [vmem:[#allocation11 + $0x50] sm:$0xff]
    %v403 = vld [vmem:[#allocation11 + $0x58] sm:$0xff]
    %v404 = vld [vmem:[#allocation11 + $0x60] sm:$0xff]
    %v405 = vld [vmem:[#allocation11 + $0x68] sm:$0xff]
    %v406 = vld [vmem:[#allocation11 + $0x70] sm:$0xff]
    %v407 = vld [vmem:[#allocation11 + $0x78] sm:$0xff]
    %v408 = vld [vmem:[#allocation11 + $0x80] sm:$0xff]
    %v409 = vld [vmem:[#allocation11 + $0x88] sm:$0xff]
    %v410 = vld [vmem:[#allocation11 + $0x90] sm:$0xff]
    %v411 = vld [vmem:[#allocation11 + $0x98] sm:$0xff]
    %v412 = vld [vmem:[#allocation11 + $0xa0] sm:$0xff]
    %v413 = vld [vmem:[#allocation11 + $0xa8] sm:$0xff]
    %v414 = vld [vmem:[#allocation11 + $0xb0] sm:$0xff]
    %v415 = vld [vmem:[#allocation11 + $0xb8] sm:$0xff]
    %v416 = vld [vmem:[#allocation11 + $0xc0] sm:$0xff]
    %v417 = vld [vmem:[#allocation11 + $0xc8] sm:$0xff]
    %v418 = vld [vmem:[#allocation11 + $0xd0] sm:$0xff]
    %v419 = vld [vmem:[#allocation11 + $0xd8] sm:$0xff]
    %v420 = vld [vmem:[#allocation11 + $0xe0] sm:$0xff]
    %v421 = vld [vmem:[#allocation11 + $0xe8] sm:$0xff]
    %v422 = vld [vmem:[#allocation11 + $0xf0] sm:$0xff]
    %v423 = vld [vmem:[#allocation11 + $0xf8] sm:$0xff]
    %v424 = vld [vmem:[#allocation11 + $0x100] sm:$0xff]
    %v425 = vld [vmem:[#allocation11 + $0x108] sm:$0xff]
    %v426 = vld [vmem:[#allocation11 + $0x110] sm:$0xff]
    %v427 = vld [vmem:[#allocation11 + $0x118] sm:$0xff]
    %v428 = vld [vmem:[#allocation11 + $0x120] sm:$0xff]
    %v429 = vld [vmem:[#allocation11 + $0x128] sm:$0xff]
    %v430 = vld [vmem:[#allocation11 + $0x130] sm:$0xff]
    %v431 = vld [vmem:[#allocation11 + $0x138] sm:$0xff]
    %v432 = vld [vmem:[#allocation11 + $0x140] sm:$0xff]
    %v433 = vld [vmem:[#allocation11 + $0x148] sm:$0xff]
    %v434 = vld [vmem:[#allocation11 + $0x150] sm:$0xff]
    %v435 = vld [vmem:[#allocation11 + $0x158] sm:$0xff]
    %v436 = vld [vmem:[#allocation11 + $0x160] sm:$0xff]
    %v437 = vld [vmem:[#allocation11 + $0x168] sm:$0xff]
    %v438 = vld [vmem:[#allocation11 + $0x170] sm:$0xff]
    %v439 = vld [vmem:[#allocation11 + $0x178] sm:$0xff]
    %v440 = vld [vmem:[#allocation11 + $0x180] sm:$0xff]
    %v441 = vld [vmem:[#allocation11 + $0x188] sm:$0xff]
    %v442 = vld [vmem:[#allocation11 + $0x190] sm:$0xff]
    %v443 = vld [vmem:[#allocation11 + $0x198] sm:$0xff]
    %v444 = vld [vmem:[#allocation11 + $0x1a0] sm:$0xff]
    %v445 = vld [vmem:[#allocation11 + $0x1a8] sm:$0xff]
    %v446 = vld [vmem:[#allocation11 + $0x1b0] sm:$0xff]
    %v447 = vld [vmem:[#allocation11 + $0x1b8] sm:$0xff]
    %v448 = vld [vmem:[#allocation11 + $0x1c0] sm:$0xff]
    %v449 = vld [vmem:[#allocation11 + $0x1c8] sm:$0xff]
    %v450 = vld [vmem:[#allocation11 + $0x1d0] sm:$0xff]
    %v451 = vld [vmem:[#allocation11 + $0x1d8] sm:$0xff]
    %v452 = vld [vmem:[#allocation11 + $0x1e0] sm:$0xff]
    %v453 = vld [vmem:[#allocation11 + $0x1e8] sm:$0xff]
    %v454 = vld [vmem:[#allocation11 + $0x1f0] sm:$0xff]
    %v455 = vld [vmem:[#allocation11 + $0x1f8] sm:$0xff]
    %v456 = vld [vmem:[#allocation11 + $0x200] sm:$0xff]
    %v457 = vld [vmem:[#allocation11 + $0x208] sm:$0xff]
    %v458 = vld [vmem:[#allocation11 + $0x210] sm:$0xff]
    %v459 = vld [vmem:[#allocation11 + $0x218] sm:$0xff]
    %v460 = vld [vmem:[#allocation11 + $0x220] sm:$0xff]
    %v461 = vld [vmem:[#allocation11 + $0x228] sm:$0xff]
    %v462 = vld [vmem:[#allocation11 + $0x230] sm:$0xff]
    %v463 = vld [vmem:[#allocation11 + $0x238] sm:$0xff]
    %v464 = vld [vmem:[#allocation11 + $0x240] sm:$0xff]
    %v465 = vld [vmem:[#allocation11 + $0x248] sm:$0xff]
    %v466 = vld [vmem:[#allocation11 + $0x250] sm:$0xff]
    %v467 = vld [vmem:[#allocation11 + $0x258] sm:$0xff]
    %v468 = vld [vmem:[#allocation11 + $0x260] sm:$0xff]
    %v469 = vld [vmem:[#allocation11 + $0x268] sm:$0xff]
    %v470 = vld [vmem:[#allocation11 + $0x270] sm:$0xff]
    %v471 = vld [vmem:[#allocation11 + $0x278] sm:$0xff]
    %v472 = vld [vmem:[#allocation11 + $0x280] sm:$0xff]
    %v473 = vld [vmem:[#allocation11 + $0x288] sm:$0xff]
    %v474 = vld [vmem:[#allocation11 + $0x290] sm:$0xff]
    %v475 = vld [vmem:[#allocation11 + $0x298] sm:$0xff]
    %v476 = vld [vmem:[#allocation11 + $0x2a0] sm:$0xff]
    %v477 = vld [vmem:[#allocation11 + $0x2a8] sm:$0xff]
    %v478 = vld [vmem:[#allocation11 + $0x2b0] sm:$0xff]
    %v479 = vld [vmem:[#allocation11 + $0x2b8] sm:$0xff]
    %v480 = vld [vmem:[#allocation11 + $0x2c0] sm:$0xff]
    %v481 = vld [vmem:[#allocation11 + $0x2c8] sm:$0xff]
    %v482 = vld [vmem:[#allocation11 + $0x2d0] sm:$0xff]
    %v483 = vld [vmem:[#allocation11 + $0x2d8] sm:$0xff]
    %v484 = vld [vmem:[#allocation11 + $0x2e0] sm:$0xff]
    %v485 = vld [vmem:[#allocation11 + $0x2e8] sm:$0xff]
    %v486 = vld [vmem:[#allocation11 + $0x2f0] sm:$0xff]
    %v487 = vld [vmem:[#allocation11 + $0x2f8] sm:$0xff]
    %v488 = vld [vmem:[#allocation11 + $0x300] sm:$0xff]
    %v489 = vld [vmem:[#allocation11 + $0x308] sm:$0xff]
    %v490 = vld [vmem:[#allocation11 + $0x310] sm:$0xff]
    %v491 = vld [vmem:[#allocation11 + $0x318] sm:$0xff]
    %v492 = vld [vmem:[#allocation11 + $0x320] sm:$0xff]
    %v493 = vld [vmem:[#allocation11 + $0x328] sm:$0xff]
    %v494 = vld [vmem:[#allocation11 + $0x330] sm:$0xff]
    %v495 = vld [vmem:[#allocation11 + $0x338] sm:$0xff]
    %v496 = vld [vmem:[#allocation11 + $0x340] sm:$0xff]
    %v497 = vld [vmem:[#allocation11 + $0x348] sm:$0xff]
    %v498 = vld [vmem:[#allocation11 + $0x350] sm:$0xff]
    %v499 = vld [vmem:[#allocation11 + $0x358] sm:$0xff]
    %v500 = vld [vmem:[#allocation11 + $0x360] sm:$0xff]
    %v501 = vld [vmem:[#allocation11 + $0x368] sm:$0xff]
    %v502 = vld [vmem:[#allocation11 + $0x370] sm:$0xff]
    %v503 = vld [vmem:[#allocation11 + $0x378] sm:$0xff]
    %v504 = vld [vmem:[#allocation11 + $0x380] sm:$0xff]
    %v505 = vld [vmem:[#allocation11 + $0x388] sm:$0xff]
    %v506 = vld [vmem:[#allocation11 + $0x390] sm:$0xff]
    %v507 = vld [vmem:[#allocation11 + $0x398] sm:$0xff]
    %v508 = vld [vmem:[#allocation11 + $0x3a0] sm:$0xff]
    %v509 = vld [vmem:[#allocation11 + $0x3a8] sm:$0xff]
    %v510 = vld [vmem:[#allocation11 + $0x3b0] sm:$0xff]
    %v511 = vld [vmem:[#allocation11 + $0x3b8] sm:$0xff]
    %v512 = vld [vmem:[#allocation11 + $0x3c0] sm:$0xff]
    %v513 = vld [vmem:[#allocation11 + $0x3c8] sm:$0xff]
    %v514 = vld [vmem:[#allocation11 + $0x3d0] sm:$0xff]
    %v515 = vld [vmem:[#allocation11 + $0x3d8] sm:$0xff]
    %v516 = vld [vmem:[#allocation11 + $0x3e0] sm:$0xff]
    %v517 = vld [vmem:[#allocation11 + $0x3e8] sm:$0xff]
    %v518 = vld [vmem:[#allocation11 + $0x3f0] sm:$0xff]
    %v519 = vld [vmem:[#allocation11 + $0x3f8] sm:$0xff]
    %v521 = vcombine.high %v391, %v391
    %v523 = vunpack.c.l.s4 1966171168
    %v524 = vunpack.c.0.s8 %v523
    %v525 = vlaneseq
    %v526 = vshrl.u32 %v525, 7
    %v527 = vsub.s32 %v524, %v526
    %v528 = vrot.slane %v391, %v527
    %v530 = vunpack.c.l.s4 1966171168
    %v531 = vunpack.c.0.s8 %v530
    %v532 = vlaneseq
    %v533 = vshrl.u32 %v532, 7
    %v534 = vsub.s32 %v531, %v533
    %v535 = vrot.slane %v521, %v534
    %v536 = vcombine.high %v528, %v528
    %v537 = vcombine.high %v535, %v535
    %v539 = vunpack.c.l.s4 1966171168
    %v540 = vunpack.c.0.s8 %v539
    %v541 = vlaneseq
    %v542 = vshrl.u32 %v541, 7
    %v543 = vsub.s32 %v540, %v542
    %v544 = vrot.slane %v528, %v543
    %v546 = vunpack.c.l.s4 1966171168
    %v547 = vunpack.c.0.s8 %v546
    %v548 = vlaneseq
    %v549 = vshrl.u32 %v548, 7
    %v550 = vsub.s32 %v547, %v549
    %v551 = vrot.slane %v535, %v550
    %v553 = vunpack.c.l.s4 1966171168
    %v554 = vunpack.c.0.s8 %v553
    %v555 = vlaneseq
    %v556 = vshrl.u32 %v555, 7
    %v557 = vsub.s32 %v554, %v556
    %v558 = vrot.slane %v536, %v557
    %v560 = vunpack.c.l.s4 1966171168
    %v561 = vunpack.c.0.s8 %v560
    %v562 = vlaneseq
    %v563 = vshrl.u32 %v562, 7
    %v564 = vsub.s32 %v561, %v563
    %v565 = vrot.slane %v537, %v564
    %v566 = vcombine.high %v544, %v544
    %v567 = vcombine.high %v551, %v551
    %v568 = vcombine.high %v558, %v558
    %v569 = vcombine.high %v565, %v565
    %v706 = vunpack.c.l.b16 %v392
    %v707 = vunpack.c.h.b16 %v392
    %v708 = vunpack.c.l.b16 %v393
    %v709 = vunpack.c.h.b16 %v393
    %v710 = vunpack.c.l.b16 %v394
    %v711 = vunpack.c.h.b16 %v394
    %v712 = vunpack.c.l.b16 %v395
    %v713 = vunpack.c.h.b16 %v395
    %v714 = vunpack.c.l.b16 %v396
    %v715 = vunpack.c.h.b16 %v396
    %v716 = vunpack.c.l.b16 %v397
    %v717 = vunpack.c.h.b16 %v397
    %v718 = vunpack.c.l.b16 %v398
    %v719 = vunpack.c.h.b16 %v398
    %v720 = vunpack.c.l.b16 %v399
    %v721 = vunpack.c.h.b16 %v399
    %v722 = vunpack.c.l.b16 %v400
    %v723 = vunpack.c.h.b16 %v400
    %v724 = vunpack.c.l.b16 %v401
    %v725 = vunpack.c.h.b16 %v401
    %v726 = vunpack.c.l.b16 %v402
    %v727 = vunpack.c.h.b16 %v402
    %v728 = vunpack.c.l.b16 %v403
    %v729 = vunpack.c.h.b16 %v403
    %v730 = vunpack.c.l.b16 %v404
    %v731 = vunpack.c.h.b16 %v404
    %v732 = vunpack.c.l.b16 %v405
    %v733 = vunpack.c.h.b16 %v405
    %v734 = vunpack.c.l.b16 %v406
    %v735 = vunpack.c.h.b16 %v406
    %v736 = vunpack.c.l.b16 %v407
    %v737 = vunpack.c.h.b16 %v407
    %v738 = vunpack.c.l.b16 %v408
    %v739 = vunpack.c.h.b16 %v408
    %v740 = vunpack.c.l.b16 %v409
    %v741 = vunpack.c.h.b16 %v409
    %v742 = vunpack.c.l.b16 %v410
    %v743 = vunpack.c.h.b16 %v410
    %v744 = vunpack.c.l.b16 %v411
    %v745 = vunpack.c.h.b16 %v411
    %v746 = vunpack.c.l.b16 %v412
    %v747 = vunpack.c.h.b16 %v412
    %v748 = vunpack.c.l.b16 %v413
    %v749 = vunpack.c.h.b16 %v413
    %v750 = vunpack.c.l.b16 %v414
    %v751 = vunpack.c.h.b16 %v414
    %v752 = vunpack.c.l.b16 %v415
    %v753 = vunpack.c.h.b16 %v415
    %v754 = vunpack.c.l.b16 %v416
    %v755 = vunpack.c.h.b16 %v416
    %v756 = vunpack.c.l.b16 %v417
    %v757 = vunpack.c.h.b16 %v417
    %v758 = vunpack.c.l.b16 %v418
    %v759 = vunpack.c.h.b16 %v418
    %v760 = vunpack.c.l.b16 %v419
    %v761 = vunpack.c.h.b16 %v419
    %v762 = vunpack.c.l.b16 %v420
    %v763 = vunpack.c.h.b16 %v420
    %v764 = vunpack.c.l.b16 %v421
    %v765 = vunpack.c.h.b16 %v421
    %v766 = vunpack.c.l.b16 %v422
    %v767 = vunpack.c.h.b16 %v422
    %v768 = vunpack.c.l.b16 %v423
    %v769 = vunpack.c.h.b16 %v423
    %v770 = vunpack.c.l.b16 %v424
    %v771 = vunpack.c.h.b16 %v424
    %v772 = vunpack.c.l.b16 %v425
    %v773 = vunpack.c.h.b16 %v425
    %v774 = vunpack.c.l.b16 %v426
    %v775 = vunpack.c.h.b16 %v426
    %v776 = vunpack.c.l.b16 %v427
    %v777 = vunpack.c.h.b16 %v427
    %v778 = vunpack.c.l.b16 %v428
    %v779 = vunpack.c.h.b16 %v428
    %v780 = vunpack.c.l.b16 %v429
    %v781 = vunpack.c.h.b16 %v429
    %v782 = vunpack.c.l.b16 %v430
    %v783 = vunpack.c.h.b16 %v430
    %v784 = vunpack.c.l.b16 %v431
    %v785 = vunpack.c.h.b16 %v431
    %v786 = vunpack.c.l.b16 %v432
    %v787 = vunpack.c.h.b16 %v432
    %v788 = vunpack.c.l.b16 %v433
    %v789 = vunpack.c.h.b16 %v433
    %v790 = vunpack.c.l.b16 %v434
    %v791 = vunpack.c.h.b16 %v434
    %v792 = vunpack.c.l.b16 %v435
    %v793 = vunpack.c.h.b16 %v435
    %v794 = vunpack.c.l.b16 %v436
    %v795 = vunpack.c.h.b16 %v436
    %v796 = vunpack.c.l.b16 %v437
    %v797 = vunpack.c.h.b16 %v437
    %v798 = vunpack.c.l.b16 %v438
    %v799 = vunpack.c.h.b16 %v438
    %v800 = vunpack.c.l.b16 %v439
    %v801 = vunpack.c.h.b16 %v439
    %v802 = vunpack.c.l.b16 %v440
    %v803 = vunpack.c.h.b16 %v440
    %v804 = vunpack.c.l.b16 %v441
    %v805 = vunpack.c.h.b16 %v441
    %v806 = vunpack.c.l.b16 %v442
    %v807 = vunpack.c.h.b16 %v442
    %v808 = vunpack.c.l.b16 %v443
    %v809 = vunpack.c.h.b16 %v443
    %v810 = vunpack.c.l.b16 %v444
    %v811 = vunpack.c.h.b16 %v444
    %v812 = vunpack.c.l.b16 %v445
    %v813 = vunpack.c.h.b16 %v445
    %v814 = vunpack.c.l.b16 %v446
    %v815 = vunpack.c.h.b16 %v446
    %v816 = vunpack.c.l.b16 %v447
    %v817 = vunpack.c.h.b16 %v447
    %v818 = vunpack.c.l.b16 %v448
    %v819 = vunpack.c.h.b16 %v448
    %v820 = vunpack.c.l.b16 %v449
    %v821 = vunpack.c.h.b16 %v449
    %v822 = vunpack.c.l.b16 %v450
    %v823 = vunpack.c.h.b16 %v450
    %v824 = vunpack.c.l.b16 %v451
    %v825 = vunpack.c.h.b16 %v451
    %v826 = vunpack.c.l.b16 %v452
    %v827 = vunpack.c.h.b16 %v452
    %v828 = vunpack.c.l.b16 %v453
    %v829 = vunpack.c.h.b16 %v453
    %v830 = vunpack.c.l.b16 %v454
    %v831 = vunpack.c.h.b16 %v454
    %v832 = vunpack.c.l.b16 %v455
    %v833 = vunpack.c.h.b16 %v455
    %v834 = vunpack.c.l.b16 %v456
    %v835 = vunpack.c.h.b16 %v456
    %v836 = vunpack.c.l.b16 %v457
    %v837 = vunpack.c.h.b16 %v457
    %v838 = vunpack.c.l.b16 %v458
    %v839 = vunpack.c.h.b16 %v458
    %v840 = vunpack.c.l.b16 %v459
    %v841 = vunpack.c.h.b16 %v459
    %v842 = vunpack.c.l.b16 %v460
    %v843 = vunpack.c.h.b16 %v460
    %v844 = vunpack.c.l.b16 %v461
    %v845 = vunpack.c.h.b16 %v461
    %v846 = vunpack.c.l.b16 %v462
    %v847 = vunpack.c.h.b16 %v462
    %v848 = vunpack.c.l.b16 %v463
    %v849 = vunpack.c.h.b16 %v463
    %v850 = vunpack.c.l.b16 %v464
    %v851 = vunpack.c.h.b16 %v464
    %v852 = vunpack.c.l.b16 %v465
    %v853 = vunpack.c.h.b16 %v465
    %v854 = vunpack.c.l.b16 %v466
    %v855 = vunpack.c.h.b16 %v466
    %v856 = vunpack.c.l.b16 %v467
    %v857 = vunpack.c.h.b16 %v467
    %v858 = vunpack.c.l.b16 %v468
    %v859 = vunpack.c.h.b16 %v468
    %v860 = vunpack.c.l.b16 %v469
    %v861 = vunpack.c.h.b16 %v469
    %v862 = vunpack.c.l.b16 %v470
    %v863 = vunpack.c.h.b16 %v470
    %v864 = vunpack.c.l.b16 %v471
    %v865 = vunpack.c.h.b16 %v471
    %v866 = vunpack.c.l.b16 %v472
    %v867 = vunpack.c.h.b16 %v472
    %v868 = vunpack.c.l.b16 %v473
    %v869 = vunpack.c.h.b16 %v473
    %v870 = vunpack.c.l.b16 %v474
    %v871 = vunpack.c.h.b16 %v474
    %v872 = vunpack.c.l.b16 %v475
    %v873 = vunpack.c.h.b16 %v475
    %v874 = vunpack.c.l.b16 %v476
    %v875 = vunpack.c.h.b16 %v476
    %v876 = vunpack.c.l.b16 %v477
    %v877 = vunpack.c.h.b16 %v477
    %v878 = vunpack.c.l.b16 %v478
    %v879 = vunpack.c.h.b16 %v478
    %v880 = vunpack.c.l.b16 %v479
    %v881 = vunpack.c.h.b16 %v479
    %v882 = vunpack.c.l.b16 %v480
    %v883 = vunpack.c.h.b16 %v480
    %v884 = vunpack.c.l.b16 %v481
    %v885 = vunpack.c.h.b16 %v481
    %v886 = vunpack.c.l.b16 %v482
    %v887 = vunpack.c.h.b16 %v482
    %v888 = vunpack.c.l.b16 %v483
    %v889 = vunpack.c.h.b16 %v483
    %v890 = vunpack.c.l.b16 %v484
    %v891 = vunpack.c.h.b16 %v484
    %v892 = vunpack.c.l.b16 %v485
    %v893 = vunpack.c.h.b16 %v485
    %v894 = vunpack.c.l.b16 %v486
    %v895 = vunpack.c.h.b16 %v486
    %v896 = vunpack.c.l.b16 %v487
    %v897 = vunpack.c.h.b16 %v487
    %v898 = vunpack.c.l.b16 %v488
    %v899 = vunpack.c.h.b16 %v488
    %v900 = vunpack.c.l.b16 %v489
    %v901 = vunpack.c.h.b16 %v489
    %v902 = vunpack.c.l.b16 %v490
    %v903 = vunpack.c.h.b16 %v490
    %v904 = vunpack.c.l.b16 %v491
    %v905 = vunpack.c.h.b16 %v491
    %v906 = vunpack.c.l.b16 %v492
    %v907 = vunpack.c.h.b16 %v492
    %v908 = vunpack.c.l.b16 %v493
    %v909 = vunpack.c.h.b16 %v493
    %v910 = vunpack.c.l.b16 %v494
    %v911 = vunpack.c.h.b16 %v494
    %v912 = vunpack.c.l.b16 %v495
    %v913 = vunpack.c.h.b16 %v495
    %v914 = vunpack.c.l.b16 %v496
    %v915 = vunpack.c.h.b16 %v496
    %v916 = vunpack.c.l.b16 %v497
    %v917 = vunpack.c.h.b16 %v497
    %v918 = vunpack.c.l.b16 %v498
    %v919 = vunpack.c.h.b16 %v498
    %v920 = vunpack.c.l.b16 %v499
    %v921 = vunpack.c.h.b16 %v499
    %v922 = vunpack.c.l.b16 %v500
    %v923 = vunpack.c.h.b16 %v500
    %v924 = vunpack.c.l.b16 %v501
    %v925 = vunpack.c.h.b16 %v501
    %v926 = vunpack.c.l.b16 %v502
    %v927 = vunpack.c.h.b16 %v502
    %v928 = vunpack.c.l.b16 %v503
    %v929 = vunpack.c.h.b16 %v503
    %v930 = vunpack.c.l.b16 %v504
    %v931 = vunpack.c.h.b16 %v504
    %v932 = vunpack.c.l.b16 %v505
    %v933 = vunpack.c.h.b16 %v505
    %v934 = vunpack.c.l.b16 %v506
    %v935 = vunpack.c.h.b16 %v506
    %v936 = vunpack.c.l.b16 %v507
    %v937 = vunpack.c.h.b16 %v507
    %v938 = vunpack.c.l.b16 %v508
    %v939 = vunpack.c.h.b16 %v508
    %v940 = vunpack.c.l.b16 %v509
    %v941 = vunpack.c.h.b16 %v509
    %v942 = vunpack.c.l.b16 %v510
    %v943 = vunpack.c.h.b16 %v510
    %v944 = vunpack.c.l.b16 %v511
    %v945 = vunpack.c.h.b16 %v511
    %v946 = vunpack.c.l.b16 %v512
    %v947 = vunpack.c.h.b16 %v512
    %v948 = vunpack.c.l.b16 %v513
    %v949 = vunpack.c.h.b16 %v513
    %v950 = vunpack.c.l.b16 %v514
    %v951 = vunpack.c.h.b16 %v514
    %v952 = vunpack.c.l.b16 %v515
    %v953 = vunpack.c.h.b16 %v515
    %v954 = vunpack.c.l.b16 %v516
    %v955 = vunpack.c.h.b16 %v516
    %v956 = vunpack.c.l.b16 %v517
    %v957 = vunpack.c.h.b16 %v517
    %v958 = vunpack.c.l.b16 %v518
    %v959 = vunpack.c.h.b16 %v518
    %v960 = vunpack.c.l.b16 %v519
    %v961 = vunpack.c.h.b16 %v519
    %v962 = vpack.c.b16 %v708, %v706
    %v963 = vpack.c.b16 %v709, %v707
    %v964 = vpack.c.b16 %v712, %v710
    %v965 = vpack.c.b16 %v713, %v711
    %v966 = vpack.c.b16 %v716, %v714
    %v967 = vpack.c.b16 %v717, %v715
    %v968 = vpack.c.b16 %v720, %v718
    %v969 = vpack.c.b16 %v721, %v719
    %v970 = vpack.c.b16 %v724, %v722
    %v971 = vpack.c.b16 %v725, %v723
    %v972 = vpack.c.b16 %v728, %v726
    %v973 = vpack.c.b16 %v729, %v727
    %v974 = vpack.c.b16 %v732, %v730
    %v975 = vpack.c.b16 %v733, %v731
    %v976 = vpack.c.b16 %v736, %v734
    %v977 = vpack.c.b16 %v737, %v735
    %v978 = vpack.c.b16 %v740, %v738
    %v979 = vpack.c.b16 %v741, %v739
    %v980 = vpack.c.b16 %v744, %v742
    %v981 = vpack.c.b16 %v745, %v743
    %v982 = vpack.c.b16 %v748, %v746
    %v983 = vpack.c.b16 %v749, %v747
    %v984 = vpack.c.b16 %v752, %v750
    %v985 = vpack.c.b16 %v753, %v751
    %v986 = vpack.c.b16 %v756, %v754
    %v987 = vpack.c.b16 %v757, %v755
    %v988 = vpack.c.b16 %v760, %v758
    %v989 = vpack.c.b16 %v761, %v759
    %v990 = vpack.c.b16 %v764, %v762
    %v991 = vpack.c.b16 %v765, %v763
    %v992 = vpack.c.b16 %v768, %v766
    %v993 = vpack.c.b16 %v769, %v767
    %v994 = vpack.c.b16 %v772, %v770
    %v995 = vpack.c.b16 %v773, %v771
    %v996 = vpack.c.b16 %v776, %v774
    %v997 = vpack.c.b16 %v777, %v775
    %v998 = vpack.c.b16 %v780, %v778
    %v999 = vpack.c.b16 %v781, %v779
    %v1000 = vpack.c.b16 %v784, %v782
    %v1001 = vpack.c.b16 %v785, %v783
    %v1002 = vpack.c.b16 %v788, %v786
    %v1003 = vpack.c.b16 %v789, %v787
    %v1004 = vpack.c.b16 %v792, %v790
    %v1005 = vpack.c.b16 %v793, %v791
    %v1006 = vpack.c.b16 %v796, %v794
    %v1007 = vpack.c.b16 %v797, %v795
    %v1008 = vpack.c.b16 %v800, %v798
    %v1009 = vpack.c.b16 %v801, %v799
    %v1010 = vpack.c.b16 %v804, %v802
    %v1011 = vpack.c.b16 %v805, %v803
    %v1012 = vpack.c.b16 %v808, %v806
    %v1013 = vpack.c.b16 %v809, %v807
    %v1014 = vpack.c.b16 %v812, %v810
    %v1015 = vpack.c.b16 %v813, %v811
    %v1016 = vpack.c.b16 %v816, %v814
    %v1017 = vpack.c.b16 %v817, %v815
    %v1018 = vpack.c.b16 %v820, %v818
    %v1019 = vpack.c.b16 %v821, %v819
    %v1020 = vpack.c.b16 %v824, %v822
    %v1021 = vpack.c.b16 %v825, %v823
    %v1022 = vpack.c.b16 %v828, %v826
    %v1023 = vpack.c.b16 %v829, %v827
    %v1024 = vpack.c.b16 %v832, %v830
    %v1025 = vpack.c.b16 %v833, %v831
    %v1026 = vpack.c.b16 %v836, %v834
    %v1027 = vpack.c.b16 %v837, %v835
    %v1028 = vpack.c.b16 %v840, %v838
    %v1029 = vpack.c.b16 %v841, %v839
    %v1030 = vpack.c.b16 %v844, %v842
    %v1031 = vpack.c.b16 %v845, %v843
    %v1032 = vpack.c.b16 %v848, %v846
    %v1033 = vpack.c.b16 %v849, %v847
    %v1034 = vpack.c.b16 %v852, %v850
    %v1035 = vpack.c.b16 %v853, %v851
    %v1036 = vpack.c.b16 %v856, %v854
    %v1037 = vpack.c.b16 %v857, %v855
    %v1038 = vpack.c.b16 %v860, %v858
    %v1039 = vpack.c.b16 %v861, %v859
    %v1040 = vpack.c.b16 %v864, %v862
    %v1041 = vpack.c.b16 %v865, %v863
    %v1042 = vpack.c.b16 %v868, %v866
    %v1043 = vpack.c.b16 %v869, %v867
    %v1044 = vpack.c.b16 %v872, %v870
    %v1045 = vpack.c.b16 %v873, %v871
    %v1046 = vpack.c.b16 %v876, %v874
    %v1047 = vpack.c.b16 %v877, %v875
    %v1048 = vpack.c.b16 %v880, %v878
    %v1049 = vpack.c.b16 %v881, %v879
    %v1050 = vpack.c.b16 %v884, %v882
    %v1051 = vpack.c.b16 %v885, %v883
    %v1052 = vpack.c.b16 %v888, %v886
    %v1053 = vpack.c.b16 %v889, %v887
    %v1054 = vpack.c.b16 %v892, %v890
    %v1055 = vpack.c.b16 %v893, %v891
    %v1056 = vpack.c.b16 %v896, %v894
    %v1057 = vpack.c.b16 %v897, %v895
    %v1058 = vpack.c.b16 %v900, %v898
    %v1059 = vpack.c.b16 %v901, %v899
    %v1060 = vpack.c.b16 %v904, %v902
    %v1061 = vpack.c.b16 %v905, %v903
    %v1062 = vpack.c.b16 %v908, %v906
    %v1063 = vpack.c.b16 %v909, %v907
    %v1064 = vpack.c.b16 %v912, %v910
    %v1065 = vpack.c.b16 %v913, %v911
    %v1066 = vpack.c.b16 %v916, %v914
    %v1067 = vpack.c.b16 %v917, %v915
    %v1068 = vpack.c.b16 %v920, %v918
    %v1069 = vpack.c.b16 %v921, %v919
    %v1070 = vpack.c.b16 %v924, %v922
    %v1071 = vpack.c.b16 %v925, %v923
    %v1072 = vpack.c.b16 %v928, %v926
    %v1073 = vpack.c.b16 %v929, %v927
    %v1074 = vpack.c.b16 %v932, %v930
    %v1075 = vpack.c.b16 %v933, %v931
    %v1076 = vpack.c.b16 %v936, %v934
    %v1077 = vpack.c.b16 %v937, %v935
    %v1078 = vpack.c.b16 %v940, %v938
    %v1079 = vpack.c.b16 %v941, %v939
    %v1080 = vpack.c.b16 %v944, %v942
    %v1081 = vpack.c.b16 %v945, %v943
    %v1082 = vpack.c.b16 %v948, %v946
    %v1083 = vpack.c.b16 %v949, %v947
    %v1084 = vpack.c.b16 %v952, %v950
    %v1085 = vpack.c.b16 %v953, %v951
    %v1086 = vpack.c.b16 %v956, %v954
    %v1087 = vpack.c.b16 %v957, %v955
    %v1088 = vpack.c.b16 %v960, %v958
    %v1089 = vpack.c.b16 %v961, %v959
    %1218 = vmatprep.subr.bf16.mxu0 %v963
    %1219 = vmatpush1.bf16.msra.mxu0 %v962
    %1220 = vmatprep.subr.bf16.mxu0 %v965
    %1221 = vmatpush1.bf16.msra.mxu0 %v964
    %1222 = vmatprep.subr.bf16.mxu0 %v967
    %1223 = vmatpush1.bf16.msra.mxu0 %v966
    %1224 = vmatprep.subr.bf16.mxu0 %v969
    %1225 = vmatpush1.bf16.msra.mxu0 %v968
    %1226 = vmatprep.subr.bf16.mxu0 %v971
    %1227 = vmatpush1.bf16.msra.mxu0 %v970
    %1228 = vmatprep.subr.bf16.mxu0 %v973
    %1229 = vmatpush1.bf16.msra.mxu0 %v972
    %1230 = vmatprep.subr.bf16.mxu0 %v975
    %1231 = vmatpush1.bf16.msra.mxu0 %v974
    %1232 = vmatprep.subr.bf16.mxu0 %v977
    %1233 = vmatpush1.bf16.msra.mxu0 %v976
    %1234 = vmatprep.subr.bf16.mxu0 %v979
    %1235 = vmatpush1.bf16.msra.mxu0 %v978
    %1236 = vmatprep.subr.bf16.mxu0 %v981
    %1237 = vmatpush1.bf16.msra.mxu0 %v980
    %1238 = vmatprep.subr.bf16.mxu0 %v983
    %1239 = vmatpush1.bf16.msra.mxu0 %v982
    %1240 = vmatprep.subr.bf16.mxu0 %v985
    %1241 = vmatpush1.bf16.msra.mxu0 %v984
    %1242 = vmatprep.subr.bf16.mxu0 %v987
    %1243 = vmatpush1.bf16.msra.mxu0 %v986
    %1244 = vmatprep.subr.bf16.mxu0 %v989
    %1245 = vmatpush1.bf16.msra.mxu0 %v988
    %1246 = vmatprep.subr.bf16.mxu0 %v991
    %1247 = vmatpush1.bf16.msra.mxu0 %v990
    %1248 = vmatprep.subr.bf16.mxu0 %v993
    %1249 = vmatpush1.bf16.msra.mxu0 %v992
    %1250 = vmatprep.mubr.bf16.mxu0 %v558
    %1251 = vmatmul.mubr.bf16.gmra.mrb[0].mxu0 %v544
    %v1252 = vpop.f32.mrb[0].mxu0
    %v1253 = vadd.f32 0.0, %v1252
    %v1254 = vpop.f32.mrb[0].mxu0
    %v1255 = vadd.f32 0.0, %v1254
    %v1256 = vpop.f32.mrb[0].mxu0
    %v1257 = vpop.f32.mrb[0].mxu0
    %1258 = vdwg.mxu0
    %1259 = vmatprep.subr.bf16.mxu0 %v995
    %1260 = vmatpush1.bf16.msra.mxu0 %v994
    %1261 = vmatprep.subr.bf16.mxu0 %v997
    %1262 = vmatpush1.bf16.msra.mxu0 %v996
    %1263 = vmatprep.subr.bf16.mxu0 %v999
    %1264 = vmatpush1.bf16.msra.mxu0 %v998
    %1265 = vmatprep.subr.bf16.mxu0 %v1001
    %1266 = vmatpush1.bf16.msra.mxu0 %v1000
    %1267 = vmatprep.subr.bf16.mxu0 %v1003
    %1268 = vmatpush1.bf16.msra.mxu0 %v1002
    %1269 = vmatprep.subr.bf16.mxu0 %v1005
    %1270 = vmatpush1.bf16.msra.mxu0 %v1004
    %1271 = vmatprep.subr.bf16.mxu0 %v1007
    %1272 = vmatpush1.bf16.msra.mxu0 %v1006
    %1273 = vmatprep.subr.bf16.mxu0 %v1009
    %1274 = vmatpush1.bf16.msra.mxu0 %v1008
    %1275 = vmatprep.subr.bf16.mxu0 %v1011
    %1276 = vmatpush1.bf16.msra.mxu0 %v1010
    %1277 = vmatprep.subr.bf16.mxu0 %v1013
    %1278 = vmatpush1.bf16.msra.mxu0 %v1012
    %1279 = vmatprep.subr.bf16.mxu0 %v1015
    %1280 = vmatpush1.bf16.msra.mxu0 %v1014
    %1281 = vmatprep.subr.bf16.mxu0 %v1017
    %1282 = vmatpush1.bf16.msra.mxu0 %v1016
    %1283 = vmatprep.subr.bf16.mxu0 %v1019
    %1284 = vmatpush1.bf16.msra.mxu0 %v1018
    %1285 = vmatprep.subr.bf16.mxu0 %v1021
    %1286 = vmatpush1.bf16.msra.mxu0 %v1020
    %1287 = vmatprep.subr.bf16.mxu0 %v1023
    %1288 = vmatpush1.bf16.msra.mxu0 %v1022
    %1289 = vmatprep.subr.bf16.mxu0 %v1025
    %1290 = vmatpush1.bf16.msra.mxu0 %v1024
    %1291 = vmatprep.mubr.bf16.mxu0 %v568
    %1292 = vmatmul.mubr.bf16.gmra.mrb[0].mxu0 %v566
    %v1293 = vpop.f32.mrb[0].mxu0
    %v1294 = vadd.f32 %v1253, %v1293
    %v1295 = vpop.f32.mrb[0].mxu0
    %v1296 = vadd.f32 %v1255, %v1295
    %v1297 = vpop.f32.mrb[0].mxu0
    %v1298 = vpop.f32.mrb[0].mxu0
    %1299 = vdwg.mxu0
    %1300 = vmatprep.subr.bf16.mxu0 %v1027
    %1301 = vmatpush1.bf16.msra.mxu0 %v1026
    %1302 = vmatprep.subr.bf16.mxu0 %v1029
    %1303 = vmatpush1.bf16.msra.mxu0 %v1028
    %1304 = vmatprep.subr.bf16.mxu0 %v1031
    %1305 = vmatpush1.bf16.msra.mxu0 %v1030
    %1306 = vmatprep.subr.bf16.mxu0 %v1033
    %1307 = vmatpush1.bf16.msra.mxu0 %v1032
    %1308 = vmatprep.subr.bf16.mxu0 %v1035
    %1309 = vmatpush1.bf16.msra.mxu0 %v1034
    %1310 = vmatprep.subr.bf16.mxu0 %v1037
    %1311 = vmatpush1.bf16.msra.mxu0 %v1036
    %1312 = vmatprep.subr.bf16.mxu0 %v1039
    %1313 = vmatpush1.bf16.msra.mxu0 %v1038
    %1314 = vmatprep.subr.bf16.mxu0 %v1041
    %1315 = vmatpush1.bf16.msra.mxu0 %v1040
    %1316 = vmatprep.subr.bf16.mxu0 %v1043
    %1317 = vmatpush1.bf16.msra.mxu0 %v1042
    %1318 = vmatprep.subr.bf16.mxu0 %v1045
    %1319 = vmatpush1.bf16.msra.mxu0 %v1044
    %1320 = vmatprep.subr.bf16.mxu0 %v1047
    %1321 = vmatpush1.bf16.msra.mxu0 %v1046
    %1322 = vmatprep.subr.bf16.mxu0 %v1049
    %1323 = vmatpush1.bf16.msra.mxu0 %v1048
    %1324 = vmatprep.subr.bf16.mxu0 %v1051
    %1325 = vmatpush1.bf16.msra.mxu0 %v1050
    %1326 = vmatprep.subr.bf16.mxu0 %v1053
    %1327 = vmatpush1.bf16.msra.mxu0 %v1052
    %1328 = vmatprep.subr.bf16.mxu0 %v1055
    %1329 = vmatpush1.bf16.msra.mxu0 %v1054
    %1330 = vmatprep.subr.bf16.mxu0 %v1057
    %1331 = vmatpush1.bf16.msra.mxu0 %v1056
    %1332 = vmatprep.mubr.bf16.mxu0 %v565
    %1333 = vmatmul.mubr.bf16.gmra.mrb[0].mxu0 %v551
    %v1334 = vpop.f32.mrb[0].mxu0
    %v1335 = vadd.f32 %v1294, %v1334
    %v1336 = vpop.f32.mrb[0].mxu0
    %v1337 = vadd.f32 %v1296, %v1336
    %v1338 = vpop.f32.mrb[0].mxu0
    %v1339 = vpop.f32.mrb[0].mxu0
    %1340 = vdwg.mxu0
    %1341 = vmatprep.subr.bf16.mxu0 %v1059
    %1342 = vmatpush1.bf16.msra.mxu0 %v1058
    %1343 = vmatprep.subr.bf16.mxu0 %v1061
    %1344 = vmatpush1.bf16.msra.mxu0 %v1060
    %1345 = vmatprep.subr.bf16.mxu0 %v1063
    %1346 = vmatpush1.bf16.msra.mxu0 %v1062
    %1347 = vmatprep.subr.bf16.mxu0 %v1065
    %1348 = vmatpush1.bf16.msra.mxu0 %v1064
    %1349 = vmatprep.subr.bf16.mxu0 %v1067
    %1350 = vmatpush1.bf16.msra.mxu0 %v1066
    %1351 = vmatprep.subr.bf16.mxu0 %v1069
    %1352 = vmatpush1.bf16.msra.mxu0 %v1068
    %1353 = vmatprep.subr.bf16.mxu0 %v1071
    %1354 = vmatpush1.bf16.msra.mxu0 %v1070
    %1355 = vmatprep.subr.bf16.mxu0 %v1073
    %1356 = vmatpush1.bf16.msra.mxu0 %v1072
    %1357 = vmatprep.subr.bf16.mxu0 %v1075
    %1358 = vmatpush1.bf16.msra.mxu0 %v1074
    %1359 = vmatprep.subr.bf16.mxu0 %v1077
    %1360 = vmatpush1.bf16.msra.mxu0 %v1076
    %1361 = vmatprep.subr.bf16.mxu0 %v1079
    %1362 = vmatpush1.bf16.msra.mxu0 %v1078
    %1363 = vmatprep.subr.bf16.mxu0 %v1081
    %1364 = vmatpush1.bf16.msra.mxu0 %v1080
    %1365 = vmatprep.subr.bf16.mxu0 %v1083
    %1366 = vmatpush1.bf16.msra.mxu0 %v1082
    %1367 = vmatprep.subr.bf16.mxu0 %v1085
    %1368 = vmatpush1.bf16.msra.mxu0 %v1084
    %1369 = vmatprep.subr.bf16.mxu0 %v1087
    %1370 = vmatpush1.bf16.msra.mxu0 %v1086
    %1371 = vmatprep.subr.bf16.mxu0 %v1089
    %1372 = vmatpush1.bf16.msra.mxu0 %v1088
    %1373 = vmatprep.mubr.bf16.mxu0 %v569
    %1374 = vmatmul.mubr.bf16.gmra.mrb[0].mxu0 %v567
    %v1375 = vpop.f32.mrb[0].mxu0
    %v1376 = vadd.f32 %v1335, %v1375
    %v1377 = vpop.f32.mrb[0].mxu0
    %v1378 = vadd.f32 %v1337, %v1377
    %v1379 = vpop.f32.mrb[0].mxu0
    %v1380 = vpop.f32.mrb[0].mxu0
    %1381 = vdwg.mxu0
    %vm1382 = vcmask 516096
    %1383 = vst.msk [vmem:[#allocation2] sm:$0x1] %vm1382, %v1376
    %1385 = vrot.lane.b32.xlu0 %v1376, 64
    %v1386 = vpop.permute.xlu0 %1385
    %1388 = vst.msk [vmem:[#allocation2 + $0x1] sm:$0x1] %vm1382, %v1386
    %1389 = vst.msk [vmem:[#allocation2 + $0x2] sm:$0x1] %vm1382, %v1378
    %1391 = vrot.lane.b32.xlu0 %v1378, 64
    %v1392 = vpop.permute.xlu0 %1391
    %1394 = vst.msk [vmem:[#allocation2 + $0x3] sm:$0x1] %vm1382, %v1392
    %vm1395 = vcmask 517121
    %1396 = vst.msk [vmem:[#allocation2 + $0x3] sm:$0x2] %vm1395, %v1376
    %1397 = vst.msk [vmem:[#allocation2 + $0x4] sm:$0x2] %vm1395, %v1386
    %1398 = vst.msk [vmem:[#allocation2 + $0x5] sm:$0x2] %vm1395, %v1378
    %1399 = vst.msk [vmem:[#allocation2 + $0x6] sm:$0x2] %vm1395, %v1392
    %v1400 = vld [vmem:[#allocation2] sm:$0xff]
    %v1401 = vpack.c.bf16 %v1400, %v1400
    %v1402 = vld [vmem:[#allocation13] sm:$0xff]
    %v1403 = vld [vmem:[#allocation13 + $0x8] sm:$0xff]
    %v1404 = vld [vmem:[#allocation13 + $0x10] sm:$0xff]
    %v1405 = vld [vmem:[#allocation13 + $0x18] sm:$0xff]
    %v1406 = vld [vmem:[#allocation13 + $0x20] sm:$0xff]
    %v1407 = vld [vmem:[#allocation13 + $0x28] sm:$0xff]
    %v1408 = vld [vmem:[#allocation13 + $0x30] sm:$0xff]
    %v1409 = vld [vmem:[#allocation13 + $0x38] sm:$0xff]
    %v1418 = vunpack.c.l.b16 %v1402
    %v1419 = vunpack.c.h.b16 %v1402
    %v1420 = vunpack.c.l.b16 %v1403
    %v1421 = vunpack.c.h.b16 %v1403
    %v1422 = vunpack.c.l.b16 %v1404
    %v1423 = vunpack.c.h.b16 %v1404
    %v1424 = vunpack.c.l.b16 %v1405
    %v1425 = vunpack.c.h.b16 %v1405
    %v1426 = vunpack.c.l.b16 %v1406
    %v1427 = vunpack.c.h.b16 %v1406
    %v1428 = vunpack.c.l.b16 %v1407
    %v1429 = vunpack.c.h.b16 %v1407
    %v1430 = vunpack.c.l.b16 %v1408
    %v1431 = vunpack.c.h.b16 %v1408
    %v1432 = vunpack.c.l.b16 %v1409
    %v1433 = vunpack.c.h.b16 %v1409
    %v1434 = vpack.c.b16 %v1420, %v1418
    %v1435 = vpack.c.b16 %v1421, %v1419
    %v1436 = vpack.c.b16 %v1424, %v1422
    %v1437 = vpack.c.b16 %v1425, %v1423
    %v1438 = vpack.c.b16 %v1428, %v1426
    %v1439 = vpack.c.b16 %v1429, %v1427
    %v1440 = vpack.c.b16 %v1432, %v1430
    %v1441 = vpack.c.b16 %v1433, %v1431
    %vm1450 = vcmask 523264
    %v1452 = vsel %vm1450, %v1401, 0
    %1454 = vmatprep.subr.bf16.mxu0 %v1435
    %1455 = vmatpush1.bf16.msra.mxu0 %v1434
    %1456 = vmatprep.subr.bf16.mxu0 %v1437
    %1457 = vmatpush1.bf16.msra.mxu0 %v1436
    %1458 = vmatprep.subr.bf16.mxu0 %v1439
    %1459 = vmatpush1.bf16.msra.mxu0 %v1438
    %1460 = vmatprep.subr.bf16.mxu0 %v1441
    %1461 = vmatpush1.bf16.msra.mxu0 %v1440
    %1462 = vmatprep.subr.bf16.mxu0 0
    %1463 = vmatpush1.bf16.msra.mxu0 0
    %1464 = vmatprep.subr.bf16.mxu0 0
    %1465 = vmatpush1.bf16.msra.mxu0 0
    %1466 = vmatprep.subr.bf16.mxu0 0
    %1467 = vmatpush1.bf16.msra.mxu0 0
    %1468 = vmatprep.subr.bf16.mxu0 0
    %1469 = vmatpush1.bf16.msra.mxu0 0
    %1470 = vmatprep.subr.bf16.mxu0 0
    %1471 = vmatpush1.bf16.msra.mxu0 0
    %1472 = vmatprep.subr.bf16.mxu0 0
    %1473 = vmatpush1.bf16.msra.mxu0 0
    %1474 = vmatprep.subr.bf16.mxu0 0
    %1475 = vmatpush1.bf16.msra.mxu0 0
    %1476 = vmatprep.subr.bf16.mxu0 0
    %1477 = vmatpush1.bf16.msra.mxu0 0
    %1478 = vmatprep.subr.bf16.mxu0 0
    %1479 = vmatpush1.bf16.msra.mxu0 0
    %1480 = vmatprep.subr.bf16.mxu0 0
    %1481 = vmatpush1.bf16.msra.mxu0 0
    %1482 = vmatprep.subr.bf16.mxu0 0
    %1483 = vmatpush1.bf16.msra.mxu0 0
    %1484 = vmatprep.subr.bf16.mxu0 0
    %1485 = vmatpush1.bf16.msra.mxu0 0
    %1486 = vmatprep.mubr.bf16.mxu0 0
    %1487 = vmatmul.mubr.bf16.gmra.mrb[0].mxu0 %v1452
    %v1488 = vpop.f32.mrb[0].mxu0
    %v1489 = vadd.f32 0.0, %v1488
    %v1490 = vpop.f32.mrb[0].mxu0
    %v1491 = vadd.f32 0.0, %v1490
    %v1492 = vpop.f32.mrb[0].mxu0
    %v1493 = vpop.f32.mrb[0].mxu0
    %1494 = vdwg.mxu0
    %v1495 = vstv %s98
    %v1496 = vmul.f32 %v1489, %v1495
    %v1497 = vmul.f32 %v1491, %v1495
    %v1498 = vxor.u32 %v1496, 2147483648
    %v1499 = vxor.u32 %v1497, 2147483648
    %v1500 = vmul.f32 %v1498, 1.442695
    %v1501 = vpow.pop %v1500
    %v1502 = vmul.f32 %v1499, 1.442695
    %v1503 = vpow.pop %v1502
    %v1504 = vadd.f32 %v1501, 1.0
    %v1505 = vadd.f32 %v1503, 1.0
    %v1506 = vrcp.pop %v1504
    %v1507 = vmul.f32 1.0, %v1506
    %v1508 = vrcp.pop %v1505
    %v1509 = vmul.f32 1.0, %v1508
    %v1510 = vstv %s100
    %v1511 = vmul.f32 %v1510, %v389
    %v1512 = vmul.f32 %v1510, %v390
    %s1513 = ssub.f32 1.0, %s100
    %v1514 = vstv %s1513
    %v1515 = vmul.f32 %v1514, %v1507
    %v1516 = vmul.f32 %v1514, %v1509
    %v1517 = vadd.f32 %v1511, %v1515
    %v1518 = vadd.f32 %v1512, %v1516
    %v1519 = vstv %s99
    %v1520 = vmul.f32 %v1517, %v1519
    %v1521 = vmul.f32 %v1518, %v1519
    %1522 = vst [vmem:[#allocation14] sm:$0xff] %v1520
    %1523 = vst [vmem:[#allocation14 + $0x8] sm:$0xff] %v1521
    %1524 = vst [vmem:[#allocation15] sm:$0xff] %v1489
    %1525 = vst [vmem:[#allocation15 + $0x8] sm:$0xff] %v1491
    // Predicated region
    $region46: #{tpu_custom_call.1} parent=1 // pred_check
      _
    $region47: #{tpu_custom_call.1} parent=1 // pred_check_branch
      %1527 = sbr.rel (0) target = $region49
    $region48: #{tpu_custom_call.1} parent=1 // pred_region
      %s1529 = ssub.s32 256, 256
      %1530 = vsyncadd [#allocation7], %s1529
      %s1532 = sshll.u32 [#allocation14], 4
      %s1533 = int_to_ptr.vmem [resolvable:$true] %s1532
      %1535 = dma.vmem_to_hbm [thread:$0]  %s1533, 256, %s7, [#allocation7]
    $region49: #{tpu_custom_call.1} parent=1 // pred_fallthru
      _
    // Predicated region
    $region50: #{tpu_custom_call.1} parent=1 // pred_check
      _
    $region51: #{tpu_custom_call.1} parent=1 // pred_check_branch
      %1537 = sbr.rel (0) target = $region53
    $region52: #{tpu_custom_call.1} parent=1 // pred_region
      %s1539 = ssub.s32 256, 256
      %1540 = vsyncadd [#allocation16], %s1539
      %s1542 = sshll.u32 [#allocation15], 4
      %s1543 = int_to_ptr.vmem [resolvable:$true] %s1542
      %1545 = dma.vmem_to_hbm [thread:$0]  %s1543, 256, %s8, [#allocation16]
    $region53: #{tpu_custom_call.1} parent=1 // pred_fallthru
      _
    // Predicated region
    $region54: #{tpu_custom_call.1} parent=1 // pred_check
      _
    $region55: #{tpu_custom_call.1} parent=1 // pred_check_branch
      %1547 = sbr.rel (0) target = $region57
    $region56: #{tpu_custom_call.1} parent=1 // pred_region
      %1548 = dma.done [#allocation7], 256
    $region57: #{tpu_custom_call.1} parent=1 // pred_fallthru
      _
    // Predicated region
    $region58: #{tpu_custom_call.1} parent=1 // pred_check
      _
    $region59: #{tpu_custom_call.1} parent=1 // pred_check_branch
      %1550 = sbr.rel (0) target = $region61
    $region60: #{tpu_custom_call.1} parent=1 // pred_region
      %1551 = dma.done [#allocation16], 256
    $region61: #{tpu_custom_call.1} parent=1 // pred_fallthru
      _
    %1552 = vsyncpa [#allocation6], 1
    %1553 = vsyncpa [#allocation9], 1
    %1554 = vsyncpa [#allocation12], 1
    %1555 = vsyncpa [#allocation7], 1
    %1556 = vsyncpa [#allocation16], 1

</llo_original>
